<compile_context>
chip_gen: v7x
topology: tpu7x:2x2x1
jax: 0.10.0
libtpu: 0.0.40
codegen_flags: <defaults>
</compile_context>

<pallas_src>
import math

import jax
import jax.numpy as jnp
from jax.experimental import pallas as pl
from jax.experimental.pallas import tpu as pltpu

LANE = 128
SUBLANE = 8


def _round_up(x, m):
    return (x + m - 1) // m * m


def _vmem_capacity_bytes():
    """Physical VMEM of the local TPU generation (v5e/v6e: 128 MiB, v7x: 64 MiB)."""
    try:
        cap = int(pltpu.get_tpu_info().vmem_capacity_bytes)
        if cap > 0:
            return cap
    except Exception:
        pass
    return 64 << 20  # conservative default (v7x per-TensorCore VMEM)


def _make_fcsampler_kernel(relu_flags, k_tiles):
    """Kernel for a fixed MLP topology.

    Layer 0's matmul is optionally K-streamed over grid axis 1 into an f32 VMEM
    accumulator; the remaining (skinny) layers plus the tanh epilogue run on the
    last K step.  relu_flags[i] says whether layer i is followed by a ReLU.
    """
    num_linear = len(relu_flags)

    def tail(h0_f32, params, out_ref):
        # layer-0 bias + activation, the remaining layers, then 0.5*(tanh(y)+1)
        # (EUP) with a lane-dense store (d_out padded to a multiple of 128).
        acc = h0_f32 + params[1][...]
        if relu_flags[0]:
            acc = jnp.maximum(acc, 0.0)
        for i in range(1, num_linear):
            h = acc.astype(jnp.bfloat16)  # keep the MXU on its bf16 path
            acc = jnp.dot(h, params[2 * i][...],
                          preferred_element_type=jnp.float32) + params[2 * i + 1][...]
            if relu_flags[i]:
                acc = jnp.maximum(acc, 0.0)
        out_ref[...] = (0.5 * (jnp.tanh(acc) + 1.0)).astype(out_ref.dtype)

    if k_tiles == 1:
        def kernel(*refs):
            x_ref, out_ref = refs[0], refs[-1]
            params = refs[1:-1]
            h0 = jnp.dot(x_ref[...].astype(jnp.bfloat16), params[0][...],
                         preferred_element_type=jnp.float32)
            tail(h0, params, out_ref)
    else:
        def kernel(*refs):
            x_ref, out_ref, acc_ref = refs[0], refs[-2], refs[-1]
            params = refs[1:-2]
            k = pl.program_id(1)

            @pl.when(k == 0)
            def _():
                acc_ref[...] = jnp.zeros_like(acc_ref)

            acc_ref[...] += jnp.dot(x_ref[...].astype(jnp.bfloat16), params[0][...],
                                    preferred_element_type=jnp.float32)

            @pl.when(k == k_tiles - 1)
            def _():
                tail(acc_ref[...], params, out_ref)

    return kernel


class FCSamplerPallas:
    """Pallas port of FCSampler (parameters initialized deterministically)."""

    MAX_TILE_B = 1024          # hard cap; actual batch tile is VMEM-budget limited
    MIN_SPLIT_B = 256          # split a single batch tile in two above this (v7x megacore)
    K_STREAM_BYTES = 8 << 20   # K-stream layer 0's weight above this many bf16 bytes

    def __init__(self, input_im_size, input_channels, output_im_size,
                 output_channels, hidden_layer_dims, key,
                 output_dtype=jnp.float32, k_stream_bytes=None, stream_tile_k=2048):
        self.input_W, self.input_C = input_im_size, input_channels
        self.output_W, self.output_C = output_im_size, output_channels
        self.output_dtype = output_dtype

        d_in = input_im_size ** 2 * input_channels
        d_out = output_im_size ** 2 * output_channels
        self.d_in, self.d_out = d_in, d_out

        # Linear stack: inp_projector, ReLU_MLP(hidden_layer_dims) linears, outp_projector.
        # ReLU placement: ReLU_MLP interleaves ReLUs between its linears and forward()
        # wraps hidden() in an explicit relu(); no activation on inp_projector's output
        # feeding the MLP, and the outp_projector gets the tanh epilogue instead.
        # (Handles len(hidden_layer_dims) == 1: the explicit relu() then lands on L0.)
        m = len(hidden_layer_dims)
        dims = [d_in] + list(hidden_layer_dims) + [d_out]
        num_ref_linear = m + 1
        ref_relu = [False] * num_ref_linear
        for i in range(1, m):
            ref_relu[i] = True
        ref_relu[m - 1] = True     # explicit relu(hidden(...)) in forward()
        ref_relu[-1] = False       # outp_projector -> tanh epilogue
        self.ref_relu = ref_relu

        # Deterministic PyTorch-style init U(-1/sqrt(fan_in), 1/sqrt(fan_in)), f32,
        # unfolded / unfused / unpadded -- kept for the exact-semantics reference.
        ref_params = []
        for i in range(num_ref_linear):
            key, kw, kb = jax.random.split(key, 3)
            bound = 1.0 / math.sqrt(dims[i])
            w = jax.random.uniform(kw, (dims[i], dims[i + 1]), jnp.float32, -bound, bound)
            b = jax.random.uniform(kb, (1, dims[i + 1]), jnp.float32, -bound, bound)
            ref_params.append((w, b))
        self.ref_params = ref_params

        # ---- fold the 2*x-1 input prescale into layer 0 ----------------------------
        w0, b0 = ref_params[0]
        eff = [(2.0 * w0, b0 - jnp.sum(w0, axis=0, keepdims=True))] + list(ref_params[1:])
        eff_relu = list(ref_relu)
        eff_dims = list(dims)

        # ---- fuse inp_projector into the first hidden linear -----------------------
        # No nonlinearity between layer 0 and layer 1 (ref_relu[0] is False), so
        # W01 = W0@W1, b01 = b0@W1 + b1 is exact in infinite precision; only done
        # when it does not grow the stored weight (padded h1 <= padded h0).
        if (len(eff) >= 2 and not eff_relu[0]
                and _round_up(eff_dims[2], LANE) <= _round_up(eff_dims[1], LANE)):
            (wa, ba), (wb, bb) = eff[0], eff[1]
            hp = jax.lax.Precision.HIGHEST
            w01 = jnp.dot(wa, wb, precision=hp, preferred_element_type=jnp.float32)
            b01 = jnp.dot(ba, wb, precision=hp, preferred_element_type=jnp.float32) + bb
            eff = [(w01, b01)] + eff[2:]
            eff_relu = [eff_relu[1]] + eff_relu[2:]
            eff_dims = [eff_dims[0]] + eff_dims[2:]
        self.num_linear = len(eff)
        self.eff_relu = eff_relu

        # ---- decide K-streaming of layer 0 (keeps wide W0 off VMEM on v7x) ---------
        n0_p = _round_up(eff_dims[1], LANE)
        if k_stream_bytes is None:
            k_stream_bytes = self.K_STREAM_BYTES
        stream_tile_k = _round_up(max(int(stream_tile_k), LANE), LANE)
        if d_in * n0_p * 2 > k_stream_bytes:
            self.tile_k = min(_round_up(d_in, LANE), stream_tile_k)
            self.d_in_p = _round_up(d_in, self.tile_k)
        else:
            self.tile_k = d_in        # full-extent K block; K stays unpadded
            self.d_in_p = d_in
        self.k_tiles = self.d_in_p // self.tile_k

        # ---- pad N dims to the lane width; bf16 weights, f32 biases ----------------
        n_pads = [_round_up(n, LANE) for n in eff_dims[1:]]
        self.n0_p, self.d_out_p = n_pads[0], n_pads[-1]
        self._max_np = max(n_pads)

        kernel_params = []
        k_p = self.d_in_p
        for i, (w, b) in enumerate(eff):
            n_p = n_pads[i]
            w_p = jnp.zeros((k_p, n_p), jnp.float32).at[:w.shape[0], :w.shape[1]].set(w)
            b_p = jnp.zeros((1, n_p), jnp.float32).at[:, :b.shape[1]].set(b)
            kernel_params += [w_p.astype(jnp.bfloat16), b_p]
            k_p = n_p
        self.kernel_params = kernel_params

        # Bytes of parameters that sit resident in VMEM (constant index_map); a
        # K-streamed layer-0 weight is excluded (it is pipelined in slabs instead).
        resident = 0
        for i in range(self.num_linear):
            if not (i == 0 and self.k_tiles > 1):
                resident += int(kernel_params[2 * i].nbytes)
            resident += int(kernel_params[2 * i + 1].nbytes)
        self._resident_param_bytes = resident
        self._streamed_slab_bytes = (2 * self.tile_k * self.n0_p * 2
                                     if self.k_tiles > 1 else 0)

        self._kernel = _make_fcsampler_kernel(tuple(self.eff_relu), self.k_tiles)

    # ---------------------------------------------------------------------------

    def __call__(self, inp_image):
        # inp_image: (B, C, H, W), NCHW (same as PyTorch).
        B = inp_image.shape[0]
        x2d = inp_image.reshape(B, -1)          # == .flatten(start_dim=1), original dtype
        x_isz = x2d.dtype.itemsize
        out_isz = jax.dtypes.canonicalize_dtype(self.output_dtype).itemsize

        vmem_cap = _vmem_capacity_bytes()

        # ---- batch tiling (VMEM-budget aware) --------------------------------------
        B_sub = _round_up(B, SUBLANE)
        per_row = (2 * self.tile_k * x_isz        # x tile, double buffered
                   + 2 * self.d_out_p * out_isz   # out tile, double buffered
                   + self.n0_p * 4                # layer-0 f32 accumulator
                   + 6 * self._max_np)            # f32 activation + bf16 re-cast transients
        budget = (int(0.75 * vmem_cap) - 2 * self._resident_param_bytes
                  - self._streamed_slab_bytes - (4 << 20))
        max_tb = max(budget // max(per_row, 1), SUBLANE)
        max_tb = min(int(max_tb), self.MAX_TILE_B)
        max_tb = (max_tb // LANE * LANE) if max_tb >= LANE else (max_tb // SUBLANE * SUBLANE)

        n_bt = pl.cdiv(B_sub, max_tb)
        if n_bt == 1 and B_sub >= self.MIN_SPLIT_B:
            n_bt = 2                               # give v7x's second TensorCore work
        tile_b = _round_up(pl.cdiv(B_sub, n_bt), SUBLANE)
        B_pad = _round_up(B_sub, tile_b)
        grid = (B_pad // tile_b, self.k_tiles)

        # ---- pad input: batch rows always; K columns only when K-streaming ---------
        pad_r, pad_c = B_pad - B, self.d_in_p - self.d_in
        if pad_r or pad_c:
            x2d = jnp.pad(x2d, ((0, pad_r), (0, pad_c)))

        x_spec = pl.BlockSpec((tile_b, self.tile_k), lambda i, k: (i, k))
        out_spec = pl.BlockSpec((tile_b, self.d_out_p), lambda i, k: (i, 0))
        scratch = ([pltpu.VMEM((tile_b, self.n0_p), jnp.float32)]
                   if self.k_tiles > 1 else [])

        # VMEM limit: actual need (weights counted double-buffered in case Buffered(1)
        # is not honored) with headroom, capped at ~85% of this generation's capacity.
        vmem_est = (2 * self._resident_param_bytes + self._streamed_slab_bytes
                    + tile_b * per_row + (4 << 20))
        vmem_limit = int(min(max(vmem_est, 32 << 20), int(0.85 * vmem_cap)))

        # Advisory cost estimate so XLA schedules the surrounding ops sensibly.
        flops, k_prev = 0, self.d_in_p
        for i in range(self.num_linear):
            n_p = self.kernel_params[2 * i].shape[1]
            flops += 2 * B_pad * k_prev * n_p
            k_prev = n_p
        param_bytes = sum(int(p.nbytes) for p in self.kernel_params)
        cost = pl.CostEstimate(
            flops=int(flops),
            transcendentals=int(B_pad * self.d_out_p),
            bytes_accessed=int(B_pad * self.d_in_p * x_isz + param_bytes
                               + B_pad * self.d_out_p * out_isz))

        def run(single_buffer_resident):
            def resident_spec(shape):
                # Constant index_map: the block is never re-fetched, so one VMEM
                # buffer suffices -- request single buffering when supported.
                if single_buffer_resident:
                    return pl.BlockSpec(shape, lambda i, k: (0, 0),
                                        pipeline_mode=pl.Buffered(1))
                return pl.BlockSpec(shape, lambda i, k: (0, 0))

            in_specs = [x_spec]
            for li in range(self.num_linear):
                w, b = self.kernel_params[2 * li], self.kernel_params[2 * li + 1]
                if li == 0 and self.k_tiles > 1:
                    # K-streamed weight: (tile_k, n0_p) slabs, default double-buffered
                    # so the DMA of slab k+1 overlaps the MXU work on slab k.
                    in_specs.append(pl.BlockSpec((self.tile_k, self.n0_p),
                                                 lambda i, k: (k, 0)))
                else:
                    in_specs.append(resident_spec(w.shape))
                in_specs.append(resident_spec(b.shape))

            return pl.pallas_call(
                self._kernel,
                out_shape=jax.ShapeDtypeStruct((B_pad, self.d_out_p), self.output_dtype),
                grid=grid,
                in_specs=in_specs,
                out_specs=out_spec,
                scratch_shapes=scratch,
                compiler_params=pltpu.CompilerParams(
                    dimension_semantics=("parallel", "arbitrary"),
                    vmem_limit_bytes=vmem_limit),
                cost_estimate=cost,
            )(x2d, *self.kernel_params)

        try:
            out_p = run(True)
        except Exception:
            # pipeline_mode=pl.Buffered(1) unsupported on this jax/Mosaic version:
            # fall back to the default double-buffered resident weights.
            out_p = run(False)

        out = out_p[:B, :self.d_out]
        return out.reshape(B, self.output_C, self.output_W, self.output_W)

    # --- references for verification ---------------------------------------------

    def reference_f32(self, inp_image):
        """Exact semantics of the original module (f32, unfolded, unfused, unpadded)."""
        B = inp_image.shape[0]
        h = 2.0 * inp_image.reshape(B, -1).astype(jnp.float32) - 1.0
        for (w, b), r in zip(self.ref_params, self.ref_relu):
            h = h @ w + b
            if r:
                h = jnp.maximum(h, 0.0)
        out = 0.5 * (jnp.tanh(h) + 1.0)
        return out.reshape(B, self.output_C, self.output_W, self.output_W)

    def reference_bf16(self, inp_image):
        """Same math as the kernel (fold+fuse, bf16 W/act, f32 accumulate) in plain jnp."""
        B = inp_image.shape[0]
        x = inp_image.reshape(B, -1)
        if self.d_in_p > self.d_in:
            x = jnp.pad(x, ((0, 0), (0, self.d_in_p - self.d_in)))
        h = x.astype(jnp.bfloat16)
        acc = None
        for i in range(self.num_linear):
            w, b = self.kernel_params[2 * i], self.kernel_params[2 * i + 1]
            acc = jnp.dot(h, w, preferred_element_type=jnp.float32) + b
            if self.eff_relu[i]:
                acc = jnp.maximum(acc, 0.0)
            h = acc.astype(jnp.bfloat16)
        out = 0.5 * (jnp.tanh(acc) + 1.0)
        return out[:, :self.d_out].reshape(B, self.output_C, self.output_W, self.output_W)


if __name__ == "__main__":
    key = jax.random.PRNGKey(0)
    k_param, k_param2, k_x = jax.random.split(key, 3)

    B = 2
    input_im_size, input_channels = 16, 4      # input  (2, 4, 16, 16)
    output_im_size, output_channels = 16, 2    # output (2, 2, 16, 16)
    hidden_layer_dims = [32, 32]

    x = jax.random.uniform(k_x, (B, input_channels, input_im_size, input_im_size),
                           jnp.float32)

    # 1) Default path: prescale fold + layer-0/1 fusion, resident weights, single K step.
    model = FCSamplerPallas(input_im_size, input_channels,
                            output_im_size, output_channels,
                            hidden_layer_dims, k_param)
    out = jax.block_until_ready(model(x))
    assert out.shape == (B, output_channels, output_im_size, output_im_size)
    assert out.dtype == jnp.float32

    err = float(jnp.max(jnp.abs(out - model.reference_bf16(x))))
    assert err < 2e-3, f"kernel vs bf16-matched reference: {err}"
    err = float(jnp.max(jnp.abs(out - model.reference_f32(x))))
    assert err < 5e-2, f"kernel vs original f32 semantics: {err}"

    # 2) K-streaming path (the structure v7x needs for very wide inp_projector weights),
    #    forced at small scale: layer 0 accumulated over 4 K-slabs of 256.
    model_ks = FCSamplerPallas(input_im_size, input_channels,
                               output_im_size, output_channels,
                               hidden_layer_dims, k_param2,
                               k_stream_bytes=0, stream_tile_k=256)
    assert model_ks.k_tiles == 4
    out_ks = jax.block_until_ready(model_ks(x))
    assert out_ks.shape == (B, output_channels, output_im_size, output_im_size)

    err = float(jnp.max(jnp.abs(out_ks - model_ks.reference_bf16(x))))
    assert err < 2e-3, f"k-streamed kernel vs bf16-matched reference: {err}"
    err = float(jnp.max(jnp.abs(out_ks - model_ks.reference_f32(x))))
    assert err < 5e-2, f"k-streamed kernel vs original f32 semantics: {err}"

    print("KERNEL_OK")
</pallas_src>

<mosaic_0001>
module attributes {stable_mosaic.version = 11 : i64} {
  func.func @kernel(%arg0: i32, %arg1: i32, %arg2: memref<8x1024xf32, #tpu.memory_space<vmem>>, %arg3: memref<1024x128xbf16, #tpu.memory_space<vmem>>, %arg4: memref<1x128xf32, #tpu.memory_space<vmem>>, %arg5: memref<128x512xbf16, #tpu.memory_space<vmem>>, %arg6: memref<1x512xf32, #tpu.memory_space<vmem>>, %arg7: memref<8x512xf32, #tpu.memory_space<vmem>>) attributes {dimension_semantics = [#tpu.dimension_semantics<parallel>, #tpu.dimension_semantics<arbitrary>], iteration_bounds = array<i64: 1, 1>, scalar_prefetch = 0 : i64, scratch_operands = 0 : i64, tpu.core_type = #tpu.core_type<tc>, window_params = [{transform_indices = @transform_0, window_bounds = array<i64: 8, 1024>}, {pipeline_mode = #tpu.pipeline_mode<synchronous>, transform_indices = @transform_1, window_bounds = array<i64: 1024, 128>}, {pipeline_mode = #tpu.pipeline_mode<synchronous>, transform_indices = @transform_2, window_bounds = array<i64: 1, 128>}, {pipeline_mode = #tpu.pipeline_mode<synchronous>, transform_indices = @transform_3, window_bounds = array<i64: 128, 512>}, {pipeline_mode = #tpu.pipeline_mode<synchronous>, transform_indices = @transform_4, window_bounds = array<i64: 1, 512>}, {transform_indices = @transform_5, window_bounds = array<i64: 8, 512>}]} {
    %c0 = arith.constant 0 : index
    %c0_0 = arith.constant 0 : index
    %0 = vector.load %arg2[%c0, %c0_0] : memref<8x1024xf32, #tpu.memory_space<vmem>>, vector<8x1024xf32>
    %1 = arith.truncf %0 : vector<8x1024xf32> to vector<8x1024xbf16>
    %c0_1 = arith.constant 0 : index
    %c0_2 = arith.constant 0 : index
    %2 = vector.load %arg3[%c0_1, %c0_2] : memref<1024x128xbf16, #tpu.memory_space<vmem>>, vector<1024x128xbf16>
    %cst = arith.constant dense<0.000000e+00> : vector<8x128xf32>
    %3 = tpu.matmul %1, %2, %cst {dimension_numbers = #tpu.dot_dimension_numbers<[1], [0], [0], [1], [0, 0, 1, 1], [], []>} : vector<8x1024xbf16>, vector<1024x128xbf16>, vector<8x128xf32> -> vector<8x128xf32>
    %c0_3 = arith.constant 0 : index
    %c0_4 = arith.constant 0 : index
    %4 = vector.load %arg4[%c0_3, %c0_4] : memref<1x128xf32, #tpu.memory_space<vmem>>, vector<1x128xf32>
    %5 = vector.broadcast %4 : vector<1x128xf32> to vector<8x128xf32>
    %6 = arith.addf %3, %5 : vector<8x128xf32>
    %cst_5 = arith.constant 0.000000e+00 : f32
    %7 = vector.broadcast %cst_5 : f32 to vector<8x128xf32>
    %8 = arith.maximumf %6, %7 : vector<8x128xf32>
    %9 = arith.truncf %8 : vector<8x128xf32> to vector<8x128xbf16>
    %c0_6 = arith.constant 0 : index
    %c0_7 = arith.constant 0 : index
    %10 = vector.load %arg5[%c0_6, %c0_7] : memref<128x512xbf16, #tpu.memory_space<vmem>>, vector<128x512xbf16>
    %cst_8 = arith.constant dense<0.000000e+00> : vector<8x512xf32>
    %11 = tpu.matmul %9, %10, %cst_8 {dimension_numbers = #tpu.dot_dimension_numbers<[1], [0], [0], [1], [0, 0, 1, 1], [], []>} : vector<8x128xbf16>, vector<128x512xbf16>, vector<8x512xf32> -> vector<8x512xf32>
    %c0_9 = arith.constant 0 : index
    %c0_10 = arith.constant 0 : index
    %12 = vector.load %arg6[%c0_9, %c0_10] : memref<1x512xf32, #tpu.memory_space<vmem>>, vector<1x512xf32>
    %13 = vector.broadcast %12 : vector<1x512xf32> to vector<8x512xf32>
    %14 = arith.addf %11, %13 : vector<8x512xf32>
    %15 = math.tanh %14 : vector<8x512xf32>
    %cst_11 = arith.constant 1.000000e+00 : f32
    %16 = vector.broadcast %cst_11 : f32 to vector<8x512xf32>
    %17 = arith.addf %15, %16 : vector<8x512xf32>
    %cst_12 = arith.constant 5.000000e-01 : f32
    %18 = vector.broadcast %cst_12 : f32 to vector<8x512xf32>
    %19 = arith.mulf %18, %17 : vector<8x512xf32>
    %c0_13 = arith.constant 0 : index
    %c0_14 = arith.constant 0 : index
    %20 = vector.load %arg7[%c0_13, %c0_14] : memref<8x512xf32, #tpu.memory_space<vmem>>, vector<8x512xf32>
    tpu.vector_store %arg7[%c0_13, %c0_14], %19 {strides = array<i32>} : memref<8x512xf32, #tpu.memory_space<vmem>>, vector<8x512xf32>,
    return
  }
  func.func @transform_0(%arg0: i32, %arg1: i32) -> (i32, i32) {
    %c0_i32 = arith.constant 0 : i32
    return %arg0, %arg1 : i32, i32
  }
  func.func @transform_1(%arg0: i32, %arg1: i32) -> (i32, i32) {
    %c0_i32 = arith.constant 0 : i32
    %c0_i32_0 = arith.constant 0 : i32
    %c0_i32_1 = arith.constant 0 : i32
    return %c0_i32, %c0_i32_0 : i32, i32
  }
  func.func @transform_2(%arg0: i32, %arg1: i32) -> (i32, i32) {
    %c0_i32 = arith.constant 0 : i32
    %c0_i32_0 = arith.constant 0 : i32
    %c0_i32_1 = arith.constant 0 : i32
    return %c0_i32, %c0_i32_0 : i32, i32
  }
  func.func @transform_3(%arg0: i32, %arg1: i32) -> (i32, i32) {
    %c0_i32 = arith.constant 0 : i32
    %c0_i32_0 = arith.constant 0 : i32
    %c0_i32_1 = arith.constant 0 : i32
    return %c0_i32, %c0_i32_0 : i32, i32
  }
  func.func @transform_4(%arg0: i32, %arg1: i32) -> (i32, i32) {
    %c0_i32 = arith.constant 0 : i32
    %c0_i32_0 = arith.constant 0 : i32
    %c0_i32_1 = arith.constant 0 : i32
    return %c0_i32, %c0_i32_0 : i32, i32
  }
  func.func @transform_5(%arg0: i32, %arg1: i32) -> (i32, i32) {
    %c0_i32 = arith.constant 0 : i32
    %c0_i32_0 = arith.constant 0 : i32
    return %arg0, %c0_i32 : i32, i32
  }
}

module attributes {stable_mosaic.version = 11 : i64} {
  func.func @kernel(%arg0: i32, %arg1: i32, %arg2: memref<8x1024xf32, #tpu.memory_space<vmem>>, %arg3: memref<1024x128xbf16, #tpu.memory_space<vmem>>, %arg4: memref<1x128xf32, #tpu.memory_space<vmem>>, %arg5: memref<128x512xbf16, #tpu.memory_space<vmem>>, %arg6: memref<1x512xf32, #tpu.memory_space<vmem>>, %arg7: memref<8x512xf32, #tpu.memory_space<vmem>>) attributes {dimension_semantics = [#tpu.dimension_semantics<parallel>, #tpu.dimension_semantics<arbitrary>], iteration_bounds = array<i64: 1, 1>, scalar_prefetch = 0 : i64, scratch_operands = 0 : i64, tpu.core_type = #tpu.core_type<tc>, window_params = [{transform_indices = @transform_0, window_bounds = array<i64: 8, 1024>}, {pipeline_mode = #tpu.pipeline_mode<synchronous>, transform_indices = @transform_1, window_bounds = array<i64: 1024, 128>}, {pipeline_mode = #tpu.pipeline_mode<synchronous>, transform_indices = @transform_2, window_bounds = array<i64: 1, 128>}, {pipeline_mode = #tpu.pipeline_mode<synchronous>, transform_indices = @transform_3, window_bounds = array<i64: 128, 512>}, {pipeline_mode = #tpu.pipeline_mode<synchronous>, transform_indices = @transform_4, window_bounds = array<i64: 1, 512>}, {transform_indices = @transform_5, window_bounds = array<i64: 8, 512>}]} {
    %c0 = arith.constant 0 : index
    %c0_0 = arith.constant 0 : index
    %0 = vector.load %arg2[%c0, %c0_0] : memref<8x1024xf32, #tpu.memory_space<vmem>>, vector<8x1024xf32>
    %1 = arith.truncf %0 : vector<8x1024xf32> to vector<8x1024xbf16>
    %c0_1 = arith.constant 0 : index
    %c0_2 = arith.constant 0 : index
    %2 = vector.load %arg3[%c0_1, %c0_2] : memref<1024x128xbf16, #tpu.memory_space<vmem>>, vector<1024x128xbf16>
    %cst = arith.constant dense<0.000000e+00> : vector<8x128xf32>
    %3 = tpu.matmul %1, %2, %cst {dimension_numbers = #tpu.dot_dimension_numbers<[1], [0], [0], [1], [0, 0, 1, 1], [], []>} : vector<8x1024xbf16>, vector<1024x128xbf16>, vector<8x128xf32> -> vector<8x128xf32>
    %c0_3 = arith.constant 0 : index
    %c0_4 = arith.constant 0 : index
    %4 = vector.load %arg4[%c0_3, %c0_4] : memref<1x128xf32, #tpu.memory_space<vmem>>, vector<1x128xf32>
    %5 = vector.broadcast %4 : vector<1x128xf32> to vector<8x128xf32>
    %6 = arith.addf %3, %5 : vector<8x128xf32>
    %cst_5 = arith.constant 0.000000e+00 : f32
    %7 = vector.broadcast %cst_5 : f32 to vector<8x128xf32>
    %8 = arith.maximumf %6, %7 : vector<8x128xf32>
    %9 = arith.truncf %8 : vector<8x128xf32> to vector<8x128xbf16>
    %c0_6 = arith.constant 0 : index
    %c0_7 = arith.constant 0 : index
    %10 = vector.load %arg5[%c0_6, %c0_7] : memref<128x512xbf16, #tpu.memory_space<vmem>>, vector<128x512xbf16>
    %cst_8 = arith.constant dense<0.000000e+00> : vector<8x512xf32>
    %11 = tpu.matmul %9, %10, %cst_8 {dimension_numbers = #tpu.dot_dimension_numbers<[1], [0], [0], [1], [0, 0, 1, 1], [], []>} : vector<8x128xbf16>, vector<128x512xbf16>, vector<8x512xf32> -> vector<8x512xf32>
    %c0_9 = arith.constant 0 : index
    %c0_10 = arith.constant 0 : index
    %12 = vector.load %arg6[%c0_9, %c0_10] : memref<1x512xf32, #tpu.memory_space<vmem>>, vector<1x512xf32>
    %13 = vector.broadcast %12 : vector<1x512xf32> to vector<8x512xf32>
    %14 = arith.addf %11, %13 : vector<8x512xf32>
    %15 = math.tanh %14 : vector<8x512xf32>
    %cst_11 = arith.constant 1.000000e+00 : f32
    %16 = vector.broadcast %cst_11 : f32 to vector<8x512xf32>
    %17 = arith.addf %15, %16 : vector<8x512xf32>
    %cst_12 = arith.constant 5.000000e-01 : f32
    %18 = vector.broadcast %cst_12 : f32 to vector<8x512xf32>
    %19 = arith.mulf %18, %17 : vector<8x512xf32>
    %c0_13 = arith.constant 0 : index
    %c0_14 = arith.constant 0 : index
    %20 = vector.load %arg7[%c0_13, %c0_14] : memref<8x512xf32, #tpu.memory_space<vmem>>, vector<8x512xf32>
    tpu.vector_store %arg7[%c0_13, %c0_14], %19 {strides = array<i32>} : memref<8x512xf32, #tpu.memory_space<vmem>>, vector<8x512xf32>,
    return
  }
  func.func @transform_0(%arg0: i32, %arg1: i32) -> (i32, i32) {
    %c0_i32 = arith.constant 0 : i32
    return %arg0, %arg1 : i32, i32
  }
  func.func @transform_1(%arg0: i32, %arg1: i32) -> (i32, i32) {
    %c0_i32 = arith.constant 0 : i32
    %c0_i32_0 = arith.constant 0 : i32
    %c0_i32_1 = arith.constant 0 : i32
    return %c0_i32, %c0_i32_0 : i32, i32
  }
  func.func @transform_2(%arg0: i32, %arg1: i32) -> (i32, i32) {
    %c0_i32 = arith.constant 0 : i32
    %c0_i32_0 = arith.constant 0 : i32
    %c0_i32_1 = arith.constant 0 : i32
    return %c0_i32, %c0_i32_0 : i32, i32
  }
  func.func @transform_3(%arg0: i32, %arg1: i32) -> (i32, i32) {
    %c0_i32 = arith.constant 0 : i32
    %c0_i32_0 = arith.constant 0 : i32
    %c0_i32_1 = arith.constant 0 : i32
    return %c0_i32, %c0_i32_0 : i32, i32
  }
  func.func @transform_4(%arg0: i32, %arg1: i32) -> (i32, i32) {
    %c0_i32 = arith.constant 0 : i32
    %c0_i32_0 = arith.constant 0 : i32
    %c0_i32_1 = arith.constant 0 : i32
    return %c0_i32, %c0_i32_0 : i32, i32
  }
  func.func @transform_5(%arg0: i32, %arg1: i32) -> (i32, i32) {
    %c0_i32 = arith.constant 0 : i32
    %c0_i32_0 = arith.constant 0 : i32
    return %arg0, %c0_i32 : i32, i32
  }
}

</mosaic_0001>

<llo_original>
// kernel: tpu_custom_call.1
$region0: #{tpu_custom_call.1}
  #allocation0 [shape = 'u32[]', space=smem, size = 0x4, offset = 0x4, fixed_abs, tag = 'smem constant byte address 0x4 - core index']
  #allocation1 [shape = 'u32[144,128]{1,0:T(1,128)}', space=vmem, size = 0x12000, scoped, tag = 'internal scratch']
  %s0 = inlined_call_operand.hbm [shape: f32[8,1024], index: 0, kind: input, shape index: {}]
  %s1 = inlined_call_operand.hbm [shape: bf16[1024,128], index: 1, kind: input, shape index: {}]
  %s2 = inlined_call_operand.vmem [shape: f32[1,128], index: 2, kind: input, shape index: {}]
  %s3 = inlined_call_operand.hbm [shape: bf16[128,512], index: 3, kind: input, shape index: {}]
  %s4 = inlined_call_operand.vmem [shape: f32[1,512], index: 4, kind: input, shape index: {}]
  %s5 = inlined_call_operand.hbm [shape: f32[8,512], index: 5, kind: output, shape index: {}]
  %s6 = sld [smem:[#allocation0]]
  $region42: #{tpu_custom_call.1} parent=0
    _
  %s8 = ssub.s32 1, %s6
  %s9 = scalar_select 0, %s8, %s6
  $region1: #{tpu_custom_call.1} parent=0
    #allocation2 [shape = 'u8[32768]{0}', space=vmem, size = 0x8000, scoped, tag = 'input window, operand 0, single buffered']
    #allocation3 [shape = 's32[1]{0}', space=sflag, size = 0x4, scoped, tag = 'scoped memory for tpu_custom_call.1']
    #allocation4 [shape = 's32[1]{0}', space=sflag, size = 0x4, scoped, tag = 'scoped memory for tpu_custom_call.1']
    #allocation5 [shape = 'u8[262144]{0}', space=vmem, size = 0x40000, scoped, tag = 'input window, operand 1, single buffered']
    #allocation6 [shape = 's32[1]{0}', space=sflag, size = 0x4, scoped, tag = 'scoped memory for tpu_custom_call.1']
    #allocation7 [shape = 'u8[131072]{0}', space=vmem, size = 0x20000, scoped, tag = 'input window, operand 3, single buffered']
    #allocation8 [shape = 'u8[16384]{0}', space=vmem, size = 0x4000, scoped, tag = 'output window, operand 0, single buffered']
    %10 = vsyncpa [#allocation3], 0
    %11 = vsyncpa [#allocation6], 0
    %12 = vsyncpa [#allocation4], 0
    // Predicated region
    $region2: #{tpu_custom_call.1} parent=1 // pred_check
      _
    $region3: #{tpu_custom_call.1} parent=1 // pred_check_branch
      %14 = sbr.rel (0) target = $region5
    $region4: #{tpu_custom_call.1} parent=1 // pred_region
      %s16 = ssub.s32 1024, 1024
      %17 = vsyncadd [#allocation3], %s16
      %s19 = sshll.u32 [#allocation2], 4
      %s20 = int_to_ptr.vmem [resolvable:$true] %s19
      %22 = dma.hbm_to_vmem [thread:$0]  %s0, 1024, %s20, [#allocation3]
    $region5: #{tpu_custom_call.1} parent=1 // pred_fallthru
      _
    // Predicated region
    $region6: #{tpu_custom_call.1} parent=1 // pred_check
      _
    $region7: #{tpu_custom_call.1} parent=1 // pred_check_branch
      %24 = sbr.rel (0) target = $region9
    $region8: #{tpu_custom_call.1} parent=1 // pred_region
      %s26 = ssub.s32 8192, 8192
      %27 = vsyncadd [#allocation6], %s26
      %s28 = sshll.u32 [#allocation5], 4
      %s29 = int_to_ptr.vmem [resolvable:$true] %s28
      %34 = dma.hbm_to_vmem [thread:$0]  %s1, 8192, %s29, [#allocation6], 64, 64, 4
    $region9: #{tpu_custom_call.1} parent=1 // pred_fallthru
      _
    // Predicated region
    $region10: #{tpu_custom_call.1} parent=1 // pred_check
      _
    $region11: #{tpu_custom_call.1} parent=1 // pred_check_branch
      %36 = sbr.rel (0) target = $region13
    $region12: #{tpu_custom_call.1} parent=1 // pred_region
      _
    $region13: #{tpu_custom_call.1} parent=1 // pred_fallthru
      _
    // Predicated region
    $region14: #{tpu_custom_call.1} parent=1 // pred_check
      _
    $region15: #{tpu_custom_call.1} parent=1 // pred_check_branch
      %38 = sbr.rel (0) target = $region17
    $region16: #{tpu_custom_call.1} parent=1 // pred_region
      %s40 = ssub.s32 4096, 4096
      %41 = vsyncadd [#allocation6], %s40
      %s42 = sshll.u32 [#allocation7], 4
      %s43 = int_to_ptr.vmem [resolvable:$true] %s42
      %48 = dma.hbm_to_vmem [thread:$0]  %s3, 4096, %s43, [#allocation6], 256, 256, 16
    $region17: #{tpu_custom_call.1} parent=1 // pred_fallthru
      _
    // Predicated region
    $region18: #{tpu_custom_call.1} parent=1 // pred_check
      _
    $region19: #{tpu_custom_call.1} parent=1 // pred_check_branch
      %50 = sbr.rel (0) target = $region21
    $region20: #{tpu_custom_call.1} parent=1 // pred_region
      _
    $region21: #{tpu_custom_call.1} parent=1 // pred_fallthru
      _
    // Predicated region
    $region22: #{tpu_custom_call.1} parent=1 // pred_check
      _
    $region23: #{tpu_custom_call.1} parent=1 // pred_check_branch
      %52 = sbr.rel (0) target = $region25
    $region24: #{tpu_custom_call.1} parent=1 // pred_region
      %53 = dma.done [#allocation3], 1024
    $region25: #{tpu_custom_call.1} parent=1 // pred_fallthru
      _
    // Predicated region
    $region26: #{tpu_custom_call.1} parent=1 // pred_check
      _
    $region27: #{tpu_custom_call.1} parent=1 // pred_check_branch
      %55 = sbr.rel (0) target = $region29
    $region28: #{tpu_custom_call.1} parent=1 // pred_region
      %56 = dma.done [#allocation6], 8192
    $region29: #{tpu_custom_call.1} parent=1 // pred_fallthru
      _
    // Predicated region
    $region30: #{tpu_custom_call.1} parent=1 // pred_check
      _
    $region31: #{tpu_custom_call.1} parent=1 // pred_check_branch
      %58 = sbr.rel (0) target = $region33
    $region32: #{tpu_custom_call.1} parent=1 // pred_region
      %59 = dma.done [#allocation6], 4096
    $region33: #{tpu_custom_call.1} parent=1 // pred_fallthru
      _
    %v61 = vld [vmem:[#allocation2] sm:$0xff]
    %v62 = vld [vmem:[#allocation2 + $0x8] sm:$0xff]
    %v63 = vld [vmem:[#allocation2 + $0x10] sm:$0xff]
    %v64 = vld [vmem:[#allocation2 + $0x18] sm:$0xff]
    %v65 = vld [vmem:[#allocation2 + $0x20] sm:$0xff]
    %v66 = vld [vmem:[#allocation2 + $0x28] sm:$0xff]
    %v67 = vld [vmem:[#allocation2 + $0x30] sm:$0xff]
    %v68 = vld [vmem:[#allocation2 + $0x38] sm:$0xff]
    %v69 = vpack.c.bf16 %v61, %v61
    %v70 = vpack.c.bf16 %v62, %v62
    %v71 = vpack.c.bf16 %v63, %v63
    %v72 = vpack.c.bf16 %v64, %v64
    %v73 = vpack.c.bf16 %v65, %v65
    %v74 = vpack.c.bf16 %v66, %v66
    %v75 = vpack.c.bf16 %v67, %v67
    %v76 = vpack.c.bf16 %v68, %v68
    %v77 = vld [vmem:[#allocation5] sm:$0xf]
    %v78 = vld [vmem:[#allocation5 + $0x4] sm:$0xf]
    %v79 = vld [vmem:[#allocation5 + $0x8] sm:$0xf]
    %v80 = vld [vmem:[#allocation5 + $0xc] sm:$0xf]
    %v81 = vld [vmem:[#allocation5 + $0x10] sm:$0xf]
    %v82 = vld [vmem:[#allocation5 + $0x14] sm:$0xf]
    %v83 = vld [vmem:[#allocation5 + $0x18] sm:$0xf]
    %v84 = vld [vmem:[#allocation5 + $0x1c] sm:$0xf]
    %v85 = vld [vmem:[#allocation5 + $0x20] sm:$0xf]
    %v86 = vld [vmem:[#allocation5 + $0x24] sm:$0xf]
    %v87 = vld [vmem:[#allocation5 + $0x28] sm:$0xf]
    %v88 = vld [vmem:[#allocation5 + $0x2c] sm:$0xf]
    %v89 = vld [vmem:[#allocation5 + $0x30] sm:$0xf]
    %v90 = vld [vmem:[#allocation5 + $0x34] sm:$0xf]
    %v91 = vld [vmem:[#allocation5 + $0x38] sm:$0xf]
    %v92 = vld [vmem:[#allocation5 + $0x3c] sm:$0xf]
    %v93 = vld [vmem:[#allocation5 + $0x40] sm:$0xf]
    %v94 = vld [vmem:[#allocation5 + $0x44] sm:$0xf]
    %v95 = vld [vmem:[#allocation5 + $0x48] sm:$0xf]
    %v96 = vld [vmem:[#allocation5 + $0x4c] sm:$0xf]
    %v97 = vld [vmem:[#allocation5 + $0x50] sm:$0xf]
    %v98 = vld [vmem:[#allocation5 + $0x54] sm:$0xf]
    %v99 = vld [vmem:[#allocation5 + $0x58] sm:$0xf]
    %v100 = vld [vmem:[#allocation5 + $0x5c] sm:$0xf]
    %v101 = vld [vmem:[#allocation5 + $0x60] sm:$0xf]
    %v102 = vld [vmem:[#allocation5 + $0x64] sm:$0xf]
    %v103 = vld [vmem:[#allocation5 + $0x68] sm:$0xf]
    %v104 = vld [vmem:[#allocation5 + $0x6c] sm:$0xf]
    %v105 = vld [vmem:[#allocation5 + $0x70] sm:$0xf]
    %v106 = vld [vmem:[#allocation5 + $0x74] sm:$0xf]
    %v107 = vld [vmem:[#allocation5 + $0x78] sm:$0xf]
    %v108 = vld [vmem:[#allocation5 + $0x7c] sm:$0xf]
    %v109 = vld [vmem:[#allocation5 + $0x80] sm:$0xf]
    %v110 = vld [vmem:[#allocation5 + $0x84] sm:$0xf]
    %v111 = vld [vmem:[#allocation5 + $0x88] sm:$0xf]
    %v112 = vld [vmem:[#allocation5 + $0x8c] sm:$0xf]
    %v113 = vld [vmem:[#allocation5 + $0x90] sm:$0xf]
    %v114 = vld [vmem:[#allocation5 + $0x94] sm:$0xf]
    %v115 = vld [vmem:[#allocation5 + $0x98] sm:$0xf]
    %v116 = vld [vmem:[#allocation5 + $0x9c] sm:$0xf]
    %v117 = vld [vmem:[#allocation5 + $0xa0] sm:$0xf]
    %v118 = vld [vmem:[#allocation5 + $0xa4] sm:$0xf]
    %v119 = vld [vmem:[#allocation5 + $0xa8] sm:$0xf]
    %v120 = vld [vmem:[#allocation5 + $0xac] sm:$0xf]
    %v121 = vld [vmem:[#allocation5 + $0xb0] sm:$0xf]
    %v122 = vld [vmem:[#allocation5 + $0xb4] sm:$0xf]
    %v123 = vld [vmem:[#allocation5 + $0xb8] sm:$0xf]
    %v124 = vld [vmem:[#allocation5 + $0xbc] sm:$0xf]
    %v125 = vld [vmem:[#allocation5 + $0xc0] sm:$0xf]
    %v126 = vld [vmem:[#allocation5 + $0xc4] sm:$0xf]
    %v127 = vld [vmem:[#allocation5 + $0xc8] sm:$0xf]
    %v128 = vld [vmem:[#allocation5 + $0xcc] sm:$0xf]
    %v129 = vld [vmem:[#allocation5 + $0xd0] sm:$0xf]
    %v130 = vld [vmem:[#allocation5 + $0xd4] sm:$0xf]
    %v131 = vld [vmem:[#allocation5 + $0xd8] sm:$0xf]
    %v132 = vld [vmem:[#allocation5 + $0xdc] sm:$0xf]
    %v133 = vld [vmem:[#allocation5 + $0xe0] sm:$0xf]
    %v134 = vld [vmem:[#allocation5 + $0xe4] sm:$0xf]
    %v135 = vld [vmem:[#allocation5 + $0xe8] sm:$0xf]
    %v136 = vld [vmem:[#allocation5 + $0xec] sm:$0xf]
    %v137 = vld [vmem:[#allocation5 + $0xf0] sm:$0xf]
    %v138 = vld [vmem:[#allocation5 + $0xf4] sm:$0xf]
    %v139 = vld [vmem:[#allocation5 + $0xf8] sm:$0xf]
    %v140 = vld [vmem:[#allocation5 + $0xfc] sm:$0xf]
    %v141 = vld [vmem:[#allocation5 + $0x100] sm:$0xf]
    %v142 = vld [vmem:[#allocation5 + $0x104] sm:$0xf]
    %v143 = vld [vmem:[#allocation5 + $0x108] sm:$0xf]
    %v144 = vld [vmem:[#allocation5 + $0x10c] sm:$0xf]
    %v145 = vld [vmem:[#allocation5 + $0x110] sm:$0xf]
    %v146 = vld [vmem:[#allocation5 + $0x114] sm:$0xf]
    %v147 = vld [vmem:[#allocation5 + $0x118] sm:$0xf]
    %v148 = vld [vmem:[#allocation5 + $0x11c] sm:$0xf]
    %v149 = vld [vmem:[#allocation5 + $0x120] sm:$0xf]
    %v150 = vld [vmem:[#allocation5 + $0x124] sm:$0xf]
    %v151 = vld [vmem:[#allocation5 + $0x128] sm:$0xf]
    %v152 = vld [vmem:[#allocation5 + $0x12c] sm:$0xf]
    %v153 = vld [vmem:[#allocation5 + $0x130] sm:$0xf]
    %v154 = vld [vmem:[#allocation5 + $0x134] sm:$0xf]
    %v155 = vld [vmem:[#allocation5 + $0x138] sm:$0xf]
    %v156 = vld [vmem:[#allocation5 + $0x13c] sm:$0xf]
    %v157 = vld [vmem:[#allocation5 + $0x140] sm:$0xf]
    %v158 = vld [vmem:[#allocation5 + $0x144] sm:$0xf]
    %v159 = vld [vmem:[#allocation5 + $0x148] sm:$0xf]
    %v160 = vld [vmem:[#allocation5 + $0x14c] sm:$0xf]
    %v161 = vld [vmem:[#allocation5 + $0x150] sm:$0xf]
    %v162 = vld [vmem:[#allocation5 + $0x154] sm:$0xf]
    %v163 = vld [vmem:[#allocation5 + $0x158] sm:$0xf]
    %v164 = vld [vmem:[#allocation5 + $0x15c] sm:$0xf]
    %v165 = vld [vmem:[#allocation5 + $0x160] sm:$0xf]
    %v166 = vld [vmem:[#allocation5 + $0x164] sm:$0xf]
    %v167 = vld [vmem:[#allocation5 + $0x168] sm:$0xf]
    %v168 = vld [vmem:[#allocation5 + $0x16c] sm:$0xf]
    %v169 = vld [vmem:[#allocation5 + $0x170] sm:$0xf]
    %v170 = vld [vmem:[#allocation5 + $0x174] sm:$0xf]
    %v171 = vld [vmem:[#allocation5 + $0x178] sm:$0xf]
    %v172 = vld [vmem:[#allocation5 + $0x17c] sm:$0xf]
    %v173 = vld [vmem:[#allocation5 + $0x180] sm:$0xf]
    %v174 = vld [vmem:[#allocation5 + $0x184] sm:$0xf]
    %v175 = vld [vmem:[#allocation5 + $0x188] sm:$0xf]
    %v176 = vld [vmem:[#allocation5 + $0x18c] sm:$0xf]
    %v177 = vld [vmem:[#allocation5 + $0x190] sm:$0xf]
    %v178 = vld [vmem:[#allocation5 + $0x194] sm:$0xf]
    %v179 = vld [vmem:[#allocation5 + $0x198] sm:$0xf]
    %v180 = vld [vmem:[#allocation5 + $0x19c] sm:$0xf]
    %v181 = vld [vmem:[#allocation5 + $0x1a0] sm:$0xf]
    %v182 = vld [vmem:[#allocation5 + $0x1a4] sm:$0xf]
    %v183 = vld [vmem:[#allocation5 + $0x1a8] sm:$0xf]
    %v184 = vld [vmem:[#allocation5 + $0x1ac] sm:$0xf]
    %v185 = vld [vmem:[#allocation5 + $0x1b0] sm:$0xf]
    %v186 = vld [vmem:[#allocation5 + $0x1b4] sm:$0xf]
    %v187 = vld [vmem:[#allocation5 + $0x1b8] sm:$0xf]
    %v188 = vld [vmem:[#allocation5 + $0x1bc] sm:$0xf]
    %v189 = vld [vmem:[#allocation5 + $0x1c0] sm:$0xf]
    %v190 = vld [vmem:[#allocation5 + $0x1c4] sm:$0xf]
    %v191 = vld [vmem:[#allocation5 + $0x1c8] sm:$0xf]
    %v192 = vld [vmem:[#allocation5 + $0x1cc] sm:$0xf]
    %v193 = vld [vmem:[#allocation5 + $0x1d0] sm:$0xf]
    %v194 = vld [vmem:[#allocation5 + $0x1d4] sm:$0xf]
    %v195 = vld [vmem:[#allocation5 + $0x1d8] sm:$0xf]
    %v196 = vld [vmem:[#allocation5 + $0x1dc] sm:$0xf]
    %v197 = vld [vmem:[#allocation5 + $0x1e0] sm:$0xf]
    %v198 = vld [vmem:[#allocation5 + $0x1e4] sm:$0xf]
    %v199 = vld [vmem:[#allocation5 + $0x1e8] sm:$0xf]
    %v200 = vld [vmem:[#allocation5 + $0x1ec] sm:$0xf]
    %v201 = vld [vmem:[#allocation5 + $0x1f0] sm:$0xf]
    %v202 = vld [vmem:[#allocation5 + $0x1f4] sm:$0xf]
    %v203 = vld [vmem:[#allocation5 + $0x1f8] sm:$0xf]
    %v204 = vld [vmem:[#allocation5 + $0x1fc] sm:$0xf]
    %v205 = vld [vmem:[%s2] sm:$0x1]
    %v207 = vlaneseq
    %v208 = vshrl.u32 %v207, 7
    %v209 = vsub.s32 0, %v208
    %v210 = vrot.slane %v205, %v209
    %v340 = vunpack.c.l.b16 %v77
    %v341 = vunpack.c.l.b16 %v78
    %v342 = vunpack.c.l.b16 %v79
    %v343 = vunpack.c.l.b16 %v80
    %v344 = vunpack.c.l.b16 %v81
    %v345 = vunpack.c.l.b16 %v82
    %v346 = vunpack.c.l.b16 %v83
    %v347 = vunpack.c.l.b16 %v84
    %v348 = vunpack.c.l.b16 %v85
    %v349 = vunpack.c.l.b16 %v86
    %v350 = vunpack.c.l.b16 %v87
    %v351 = vunpack.c.l.b16 %v88
    %v352 = vunpack.c.l.b16 %v89
    %v353 = vunpack.c.l.b16 %v90
    %v354 = vunpack.c.l.b16 %v91
    %v355 = vunpack.c.l.b16 %v92
    %v356 = vunpack.c.l.b16 %v93
    %v357 = vunpack.c.l.b16 %v94
    %v358 = vunpack.c.l.b16 %v95
    %v359 = vunpack.c.l.b16 %v96
    %v360 = vunpack.c.l.b16 %v97
    %v361 = vunpack.c.l.b16 %v98
    %v362 = vunpack.c.l.b16 %v99
    %v363 = vunpack.c.l.b16 %v100
    %v364 = vunpack.c.l.b16 %v101
    %v365 = vunpack.c.l.b16 %v102
    %v366 = vunpack.c.l.b16 %v103
    %v367 = vunpack.c.l.b16 %v104
    %v368 = vunpack.c.l.b16 %v105
    %v369 = vunpack.c.l.b16 %v106
    %v370 = vunpack.c.l.b16 %v107
    %v371 = vunpack.c.l.b16 %v108
    %v372 = vunpack.c.l.b16 %v109
    %v373 = vunpack.c.l.b16 %v110
    %v374 = vunpack.c.l.b16 %v111
    %v375 = vunpack.c.l.b16 %v112
    %v376 = vunpack.c.l.b16 %v113
    %v377 = vunpack.c.l.b16 %v114
    %v378 = vunpack.c.l.b16 %v115
    %v379 = vunpack.c.l.b16 %v116
    %v380 = vunpack.c.l.b16 %v117
    %v381 = vunpack.c.l.b16 %v118
    %v382 = vunpack.c.l.b16 %v119
    %v383 = vunpack.c.l.b16 %v120
    %v384 = vunpack.c.l.b16 %v121
    %v385 = vunpack.c.l.b16 %v122
    %v386 = vunpack.c.l.b16 %v123
    %v387 = vunpack.c.l.b16 %v124
    %v388 = vunpack.c.l.b16 %v125
    %v389 = vunpack.c.l.b16 %v126
    %v390 = vunpack.c.l.b16 %v127
    %v391 = vunpack.c.l.b16 %v128
    %v392 = vunpack.c.l.b16 %v129
    %v393 = vunpack.c.l.b16 %v130
    %v394 = vunpack.c.l.b16 %v131
    %v395 = vunpack.c.l.b16 %v132
    %v396 = vunpack.c.l.b16 %v133
    %v397 = vunpack.c.l.b16 %v134
    %v398 = vunpack.c.l.b16 %v135
    %v399 = vunpack.c.l.b16 %v136
    %v400 = vunpack.c.l.b16 %v137
    %v401 = vunpack.c.l.b16 %v138
    %v402 = vunpack.c.l.b16 %v139
    %v403 = vunpack.c.l.b16 %v140
    %v404 = vunpack.c.l.b16 %v141
    %v405 = vunpack.c.l.b16 %v142
    %v406 = vunpack.c.l.b16 %v143
    %v407 = vunpack.c.l.b16 %v144
    %v408 = vunpack.c.l.b16 %v145
    %v409 = vunpack.c.l.b16 %v146
    %v410 = vunpack.c.l.b16 %v147
    %v411 = vunpack.c.l.b16 %v148
    %v412 = vunpack.c.l.b16 %v149
    %v413 = vunpack.c.l.b16 %v150
    %v414 = vunpack.c.l.b16 %v151
    %v415 = vunpack.c.l.b16 %v152
    %v416 = vunpack.c.l.b16 %v153
    %v417 = vunpack.c.l.b16 %v154
    %v418 = vunpack.c.l.b16 %v155
    %v419 = vunpack.c.l.b16 %v156
    %v420 = vunpack.c.l.b16 %v157
    %v421 = vunpack.c.l.b16 %v158
    %v422 = vunpack.c.l.b16 %v159
    %v423 = vunpack.c.l.b16 %v160
    %v424 = vunpack.c.l.b16 %v161
    %v425 = vunpack.c.l.b16 %v162
    %v426 = vunpack.c.l.b16 %v163
    %v427 = vunpack.c.l.b16 %v164
    %v428 = vunpack.c.l.b16 %v165
    %v429 = vunpack.c.l.b16 %v166
    %v430 = vunpack.c.l.b16 %v167
    %v431 = vunpack.c.l.b16 %v168
    %v432 = vunpack.c.l.b16 %v169
    %v433 = vunpack.c.l.b16 %v170
    %v434 = vunpack.c.l.b16 %v171
    %v435 = vunpack.c.l.b16 %v172
    %v436 = vunpack.c.l.b16 %v173
    %v437 = vunpack.c.l.b16 %v174
    %v438 = vunpack.c.l.b16 %v175
    %v439 = vunpack.c.l.b16 %v176
    %v440 = vunpack.c.l.b16 %v177
    %v441 = vunpack.c.l.b16 %v178
    %v442 = vunpack.c.l.b16 %v179
    %v443 = vunpack.c.l.b16 %v180
    %v444 = vunpack.c.l.b16 %v181
    %v445 = vunpack.c.l.b16 %v182
    %v446 = vunpack.c.l.b16 %v183
    %v447 = vunpack.c.l.b16 %v184
    %v448 = vunpack.c.l.b16 %v185
    %v449 = vunpack.c.l.b16 %v186
    %v450 = vunpack.c.l.b16 %v187
    %v451 = vunpack.c.l.b16 %v188
    %v452 = vunpack.c.l.b16 %v189
    %v453 = vunpack.c.l.b16 %v190
    %v454 = vunpack.c.l.b16 %v191
    %v455 = vunpack.c.l.b16 %v192
    %v456 = vunpack.c.l.b16 %v193
    %v457 = vunpack.c.l.b16 %v194
    %v458 = vunpack.c.l.b16 %v195
    %v459 = vunpack.c.l.b16 %v196
    %v460 = vunpack.c.l.b16 %v197
    %v461 = vunpack.c.l.b16 %v198
    %v462 = vunpack.c.l.b16 %v199
    %v463 = vunpack.c.l.b16 %v200
    %v464 = vunpack.c.l.b16 %v201
    %v465 = vunpack.c.l.b16 %v202
    %v466 = vunpack.c.l.b16 %v203
    %v467 = vunpack.c.l.b16 %v204
    %v468 = vpack.c.b16 %v341, %v340
    %v469 = vpack.c.b16 %v343, %v342
    %v470 = vpack.c.b16 %v345, %v344
    %v471 = vpack.c.b16 %v347, %v346
    %v472 = vpack.c.b16 %v349, %v348
    %v473 = vpack.c.b16 %v351, %v350
    %v474 = vpack.c.b16 %v353, %v352
    %v475 = vpack.c.b16 %v355, %v354
    %v476 = vpack.c.b16 %v357, %v356
    %v477 = vpack.c.b16 %v359, %v358
    %v478 = vpack.c.b16 %v361, %v360
    %v479 = vpack.c.b16 %v363, %v362
    %v480 = vpack.c.b16 %v365, %v364
    %v481 = vpack.c.b16 %v367, %v366
    %v482 = vpack.c.b16 %v369, %v368
    %v483 = vpack.c.b16 %v371, %v370
    %v484 = vpack.c.b16 %v373, %v372
    %v485 = vpack.c.b16 %v375, %v374
    %v486 = vpack.c.b16 %v377, %v376
    %v487 = vpack.c.b16 %v379, %v378
    %v488 = vpack.c.b16 %v381, %v380
    %v489 = vpack.c.b16 %v383, %v382
    %v490 = vpack.c.b16 %v385, %v384
    %v491 = vpack.c.b16 %v387, %v386
    %v492 = vpack.c.b16 %v389, %v388
    %v493 = vpack.c.b16 %v391, %v390
    %v494 = vpack.c.b16 %v393, %v392
    %v495 = vpack.c.b16 %v395, %v394
    %v496 = vpack.c.b16 %v397, %v396
    %v497 = vpack.c.b16 %v399, %v398
    %v498 = vpack.c.b16 %v401, %v400
    %v499 = vpack.c.b16 %v403, %v402
    %v500 = vpack.c.b16 %v405, %v404
    %v501 = vpack.c.b16 %v407, %v406
    %v502 = vpack.c.b16 %v409, %v408
    %v503 = vpack.c.b16 %v411, %v410
    %v504 = vpack.c.b16 %v413, %v412
    %v505 = vpack.c.b16 %v415, %v414
    %v506 = vpack.c.b16 %v417, %v416
    %v507 = vpack.c.b16 %v419, %v418
    %v508 = vpack.c.b16 %v421, %v420
    %v509 = vpack.c.b16 %v423, %v422
    %v510 = vpack.c.b16 %v425, %v424
    %v511 = vpack.c.b16 %v427, %v426
    %v512 = vpack.c.b16 %v429, %v428
    %v513 = vpack.c.b16 %v431, %v430
    %v514 = vpack.c.b16 %v433, %v432
    %v515 = vpack.c.b16 %v435, %v434
    %v516 = vpack.c.b16 %v437, %v436
    %v517 = vpack.c.b16 %v439, %v438
    %v518 = vpack.c.b16 %v441, %v440
    %v519 = vpack.c.b16 %v443, %v442
    %v520 = vpack.c.b16 %v445, %v444
    %v521 = vpack.c.b16 %v447, %v446
    %v522 = vpack.c.b16 %v449, %v448
    %v523 = vpack.c.b16 %v451, %v450
    %v524 = vpack.c.b16 %v453, %v452
    %v525 = vpack.c.b16 %v455, %v454
    %v526 = vpack.c.b16 %v457, %v456
    %v527 = vpack.c.b16 %v459, %v458
    %v528 = vpack.c.b16 %v461, %v460
    %v529 = vpack.c.b16 %v463, %v462
    %v530 = vpack.c.b16 %v465, %v464
    %v531 = vpack.c.b16 %v467, %v466
    %596 = vmatprep.subr.bf16.mxu0 0
    %597 = vmatpush1.bf16.msra.mxu0 %v468
    %598 = vmatprep.subr.bf16.mxu0 0
    %599 = vmatpush1.bf16.msra.mxu0 %v469
    %600 = vmatprep.subr.bf16.mxu0 0
    %601 = vmatpush1.bf16.msra.mxu0 %v470
    %602 = vmatprep.subr.bf16.mxu0 0
    %603 = vmatpush1.bf16.msra.mxu0 %v471
    %604 = vmatprep.subr.bf16.mxu0 0
    %605 = vmatpush1.bf16.msra.mxu0 %v472
    %606 = vmatprep.subr.bf16.mxu0 0
    %607 = vmatpush1.bf16.msra.mxu0 %v473
    %608 = vmatprep.subr.bf16.mxu0 0
    %609 = vmatpush1.bf16.msra.mxu0 %v474
    %610 = vmatprep.subr.bf16.mxu0 0
    %611 = vmatpush1.bf16.msra.mxu0 %v475
    %612 = vmatprep.subr.bf16.mxu0 0
    %613 = vmatpush1.bf16.msra.mxu0 %v476
    %614 = vmatprep.subr.bf16.mxu0 0
    %615 = vmatpush1.bf16.msra.mxu0 %v477
    %616 = vmatprep.subr.bf16.mxu0 0
    %617 = vmatpush1.bf16.msra.mxu0 %v478
    %618 = vmatprep.subr.bf16.mxu0 0
    %619 = vmatpush1.bf16.msra.mxu0 %v479
    %620 = vmatprep.subr.bf16.mxu0 0
    %621 = vmatpush1.bf16.msra.mxu0 %v480
    %622 = vmatprep.subr.bf16.mxu0 0
    %623 = vmatpush1.bf16.msra.mxu0 %v481
    %624 = vmatprep.subr.bf16.mxu0 0
    %625 = vmatpush1.bf16.msra.mxu0 %v482
    %626 = vmatprep.subr.bf16.mxu0 0
    %627 = vmatpush1.bf16.msra.mxu0 %v483
    %628 = vmatprep.mubr.bf16.mxu0 %v70
    %629 = vmatmul.mubr.bf16.gmra.mrb[0].mxu0 %v69
    %v630 = vpop.f32.mrb[0].mxu0
    %v631 = vadd.f32 %v210, %v630
    %v632 = vpop.f32.mrb[0].mxu0
    %v633 = vpop.f32.mrb[0].mxu0
    %v634 = vpop.f32.mrb[0].mxu0
    %635 = vdwg.mxu0
    %636 = vmatprep.subr.bf16.mxu0 0
    %637 = vmatpush1.bf16.msra.mxu0 %v484
    %638 = vmatprep.subr.bf16.mxu0 0
    %639 = vmatpush1.bf16.msra.mxu0 %v485
    %640 = vmatprep.subr.bf16.mxu0 0
    %641 = vmatpush1.bf16.msra.mxu0 %v486
    %642 = vmatprep.subr.bf16.mxu0 0
    %643 = vmatpush1.bf16.msra.mxu0 %v487
    %644 = vmatprep.subr.bf16.mxu0 0
    %645 = vmatpush1.bf16.msra.mxu0 %v488
    %646 = vmatprep.subr.bf16.mxu0 0
    %647 = vmatpush1.bf16.msra.mxu0 %v489
    %648 = vmatprep.subr.bf16.mxu0 0
    %649 = vmatpush1.bf16.msra.mxu0 %v490
    %650 = vmatprep.subr.bf16.mxu0 0
    %651 = vmatpush1.bf16.msra.mxu0 %v491
    %652 = vmatprep.subr.bf16.mxu0 0
    %653 = vmatpush1.bf16.msra.mxu0 %v492
    %654 = vmatprep.subr.bf16.mxu0 0
    %655 = vmatpush1.bf16.msra.mxu0 %v493
    %656 = vmatprep.subr.bf16.mxu0 0
    %657 = vmatpush1.bf16.msra.mxu0 %v494
    %658 = vmatprep.subr.bf16.mxu0 0
    %659 = vmatpush1.bf16.msra.mxu0 %v495
    %660 = vmatprep.subr.bf16.mxu0 0
    %661 = vmatpush1.bf16.msra.mxu0 %v496
    %662 = vmatprep.subr.bf16.mxu0 0
    %663 = vmatpush1.bf16.msra.mxu0 %v497
    %664 = vmatprep.subr.bf16.mxu0 0
    %665 = vmatpush1.bf16.msra.mxu0 %v498
    %666 = vmatprep.subr.bf16.mxu0 0
    %667 = vmatpush1.bf16.msra.mxu0 %v499
    %668 = vmatprep.mubr.bf16.mxu0 %v72
    %669 = vmatmul.mubr.bf16.gmra.mrb[0].mxu0 %v71
    %v670 = vpop.f32.mrb[0].mxu0
    %v671 = vadd.f32 %v631, %v670
    %v672 = vpop.f32.mrb[0].mxu0
    %v673 = vpop.f32.mrb[0].mxu0
    %v674 = vpop.f32.mrb[0].mxu0
    %675 = vdwg.mxu0
    %676 = vmatprep.subr.bf16.mxu0 0
    %677 = vmatpush1.bf16.msra.mxu0 %v500
    %678 = vmatprep.subr.bf16.mxu0 0
    %679 = vmatpush1.bf16.msra.mxu0 %v501
    %680 = vmatprep.subr.bf16.mxu0 0
    %681 = vmatpush1.bf16.msra.mxu0 %v502
    %682 = vmatprep.subr.bf16.mxu0 0
    %683 = vmatpush1.bf16.msra.mxu0 %v503
    %684 = vmatprep.subr.bf16.mxu0 0
    %685 = vmatpush1.bf16.msra.mxu0 %v504
    %686 = vmatprep.subr.bf16.mxu0 0
    %687 = vmatpush1.bf16.msra.mxu0 %v505
    %688 = vmatprep.subr.bf16.mxu0 0
    %689 = vmatpush1.bf16.msra.mxu0 %v506
    %690 = vmatprep.subr.bf16.mxu0 0
    %691 = vmatpush1.bf16.msra.mxu0 %v507
    %692 = vmatprep.subr.bf16.mxu0 0
    %693 = vmatpush1.bf16.msra.mxu0 %v508
    %694 = vmatprep.subr.bf16.mxu0 0
    %695 = vmatpush1.bf16.msra.mxu0 %v509
    %696 = vmatprep.subr.bf16.mxu0 0
    %697 = vmatpush1.bf16.msra.mxu0 %v510
    %698 = vmatprep.subr.bf16.mxu0 0
    %699 = vmatpush1.bf16.msra.mxu0 %v511
    %700 = vmatprep.subr.bf16.mxu0 0
    %701 = vmatpush1.bf16.msra.mxu0 %v512
    %702 = vmatprep.subr.bf16.mxu0 0
    %703 = vmatpush1.bf16.msra.mxu0 %v513
    %704 = vmatprep.subr.bf16.mxu0 0
    %705 = vmatpush1.bf16.msra.mxu0 %v514
    %706 = vmatprep.subr.bf16.mxu0 0
    %707 = vmatpush1.bf16.msra.mxu0 %v515
    %708 = vmatprep.mubr.bf16.mxu0 %v74
    %709 = vmatmul.mubr.bf16.gmra.mrb[0].mxu0 %v73
    %v710 = vpop.f32.mrb[0].mxu0
    %v711 = vadd.f32 %v671, %v710
    %v712 = vpop.f32.mrb[0].mxu0
    %v713 = vpop.f32.mrb[0].mxu0
    %v714 = vpop.f32.mrb[0].mxu0
    %715 = vdwg.mxu0
    %716 = vmatprep.subr.bf16.mxu0 0
    %717 = vmatpush1.bf16.msra.mxu0 %v516
    %718 = vmatprep.subr.bf16.mxu0 0
    %719 = vmatpush1.bf16.msra.mxu0 %v517
    %720 = vmatprep.subr.bf16.mxu0 0
    %721 = vmatpush1.bf16.msra.mxu0 %v518
    %722 = vmatprep.subr.bf16.mxu0 0
    %723 = vmatpush1.bf16.msra.mxu0 %v519
    %724 = vmatprep.subr.bf16.mxu0 0
    %725 = vmatpush1.bf16.msra.mxu0 %v520
    %726 = vmatprep.subr.bf16.mxu0 0
    %727 = vmatpush1.bf16.msra.mxu0 %v521
    %728 = vmatprep.subr.bf16.mxu0 0
    %729 = vmatpush1.bf16.msra.mxu0 %v522
    %730 = vmatprep.subr.bf16.mxu0 0
    %731 = vmatpush1.bf16.msra.mxu0 %v523
    %732 = vmatprep.subr.bf16.mxu0 0
    %733 = vmatpush1.bf16.msra.mxu0 %v524
    %734 = vmatprep.subr.bf16.mxu0 0
    %735 = vmatpush1.bf16.msra.mxu0 %v525
    %736 = vmatprep.subr.bf16.mxu0 0
    %737 = vmatpush1.bf16.msra.mxu0 %v526
    %738 = vmatprep.subr.bf16.mxu0 0
    %739 = vmatpush1.bf16.msra.mxu0 %v527
    %740 = vmatprep.subr.bf16.mxu0 0
    %741 = vmatpush1.bf16.msra.mxu0 %v528
    %742 = vmatprep.subr.bf16.mxu0 0
    %743 = vmatpush1.bf16.msra.mxu0 %v529
    %744 = vmatprep.subr.bf16.mxu0 0
    %745 = vmatpush1.bf16.msra.mxu0 %v530
    %746 = vmatprep.subr.bf16.mxu0 0
    %747 = vmatpush1.bf16.msra.mxu0 %v531
    %748 = vmatprep.mubr.bf16.mxu0 %v76
    %749 = vmatmul.mubr.bf16.gmra.mrb[0].mxu0 %v75
    %v750 = vpop.f32.mrb[0].mxu0
    %v751 = vadd.f32 %v711, %v750
    %v752 = vpop.f32.mrb[0].mxu0
    %v753 = vpop.f32.mrb[0].mxu0
    %v754 = vpop.f32.mrb[0].mxu0
    %755 = vdwg.mxu0
    %v756 = vmax.f32 %v751, 0.0
    %v757 = vpack.c.bf16 %v756, %v756
    %v758 = vld [vmem:[#allocation7] sm:$0xff]
    %v759 = vld [vmem:[#allocation7 + $0x8] sm:$0xff]
    %v760 = vld [vmem:[#allocation7 + $0x10] sm:$0xff]
    %v761 = vld [vmem:[#allocation7 + $0x18] sm:$0xff]
    %v762 = vld [vmem:[#allocation7 + $0x20] sm:$0xff]
    %v763 = vld [vmem:[#allocation7 + $0x28] sm:$0xff]
    %v764 = vld [vmem:[#allocation7 + $0x30] sm:$0xff]
    %v765 = vld [vmem:[#allocation7 + $0x38] sm:$0xff]
    %v766 = vld [vmem:[#allocation7 + $0x40] sm:$0xff]
    %v767 = vld [vmem:[#allocation7 + $0x48] sm:$0xff]
    %v768 = vld [vmem:[#allocation7 + $0x50] sm:$0xff]
    %v769 = vld [vmem:[#allocation7 + $0x58] sm:$0xff]
    %v770 = vld [vmem:[#allocation7 + $0x60] sm:$0xff]
    %v771 = vld [vmem:[#allocation7 + $0x68] sm:$0xff]
    %v772 = vld [vmem:[#allocation7 + $0x70] sm:$0xff]
    %v773 = vld [vmem:[#allocation7 + $0x78] sm:$0xff]
    %v774 = vld [vmem:[#allocation7 + $0x80] sm:$0xff]
    %v775 = vld [vmem:[#allocation7 + $0x88] sm:$0xff]
    %v776 = vld [vmem:[#allocation7 + $0x90] sm:$0xff]
    %v777 = vld [vmem:[#allocation7 + $0x98] sm:$0xff]
    %v778 = vld [vmem:[#allocation7 + $0xa0] sm:$0xff]
    %v779 = vld [vmem:[#allocation7 + $0xa8] sm:$0xff]
    %v780 = vld [vmem:[#allocation7 + $0xb0] sm:$0xff]
    %v781 = vld [vmem:[#allocation7 + $0xb8] sm:$0xff]
    %v782 = vld [vmem:[#allocation7 + $0xc0] sm:$0xff]
    %v783 = vld [vmem:[#allocation7 + $0xc8] sm:$0xff]
    %v784 = vld [vmem:[#allocation7 + $0xd0] sm:$0xff]
    %v785 = vld [vmem:[#allocation7 + $0xd8] sm:$0xff]
    %v786 = vld [vmem:[#allocation7 + $0xe0] sm:$0xff]
    %v787 = vld [vmem:[#allocation7 + $0xe8] sm:$0xff]
    %v788 = vld [vmem:[#allocation7 + $0xf0] sm:$0xff]
    %v789 = vld [vmem:[#allocation7 + $0xf8] sm:$0xff]
    %v790 = vld [vmem:[%s4] sm:$0xf]
    %v792 = vlaneseq
    %v793 = vshrl.u32 %v792, 7
    %v794 = vsub.s32 0, %v793
    %v795 = vrot.slane %v790, %v794
    %v796 = vlaneseq
    %v797 = vshrl.u32 %v796, 7
    %v798 = vsub.s32 1, %v797
    %v799 = vrot.slane %v790, %v798
    %v800 = vlaneseq
    %v801 = vshrl.u32 %v800, 7
    %v802 = vsub.s32 2, %v801
    %v803 = vrot.slane %v790, %v802
    %v804 = vlaneseq
    %v805 = vshrl.u32 %v804, 7
    %v806 = vsub.s32 3, %v805
    %v807 = vrot.slane %v790, %v806
    %v844 = vunpack.c.l.b16 %v758
    %v845 = vunpack.c.h.b16 %v758
    %v846 = vunpack.c.l.b16 %v759
    %v847 = vunpack.c.h.b16 %v759
    %v848 = vunpack.c.l.b16 %v760
    %v849 = vunpack.c.h.b16 %v760
    %v850 = vunpack.c.l.b16 %v761
    %v851 = vunpack.c.h.b16 %v761
    %v852 = vunpack.c.l.b16 %v762
    %v853 = vunpack.c.h.b16 %v762
    %v854 = vunpack.c.l.b16 %v763
    %v855 = vunpack.c.h.b16 %v763
    %v856 = vunpack.c.l.b16 %v764
    %v857 = vunpack.c.h.b16 %v764
    %v858 = vunpack.c.l.b16 %v765
    %v859 = vunpack.c.h.b16 %v765
    %v860 = vunpack.c.l.b16 %v766
    %v861 = vunpack.c.h.b16 %v766
    %v862 = vunpack.c.l.b16 %v767
    %v863 = vunpack.c.h.b16 %v767
    %v864 = vunpack.c.l.b16 %v768
    %v865 = vunpack.c.h.b16 %v768
    %v866 = vunpack.c.l.b16 %v769
    %v867 = vunpack.c.h.b16 %v769
    %v868 = vunpack.c.l.b16 %v770
    %v869 = vunpack.c.h.b16 %v770
    %v870 = vunpack.c.l.b16 %v771
    %v871 = vunpack.c.h.b16 %v771
    %v872 = vunpack.c.l.b16 %v772
    %v873 = vunpack.c.h.b16 %v772
    %v874 = vunpack.c.l.b16 %v773
    %v875 = vunpack.c.h.b16 %v773
    %v876 = vunpack.c.l.b16 %v774
    %v877 = vunpack.c.h.b16 %v774
    %v878 = vunpack.c.l.b16 %v775
    %v879 = vunpack.c.h.b16 %v775
    %v880 = vunpack.c.l.b16 %v776
    %v881 = vunpack.c.h.b16 %v776
    %v882 = vunpack.c.l.b16 %v777
    %v883 = vunpack.c.h.b16 %v777
    %v884 = vunpack.c.l.b16 %v778
    %v885 = vunpack.c.h.b16 %v778
    %v886 = vunpack.c.l.b16 %v779
    %v887 = vunpack.c.h.b16 %v779
    %v888 = vunpack.c.l.b16 %v780
    %v889 = vunpack.c.h.b16 %v780
    %v890 = vunpack.c.l.b16 %v781
    %v891 = vunpack.c.h.b16 %v781
    %v892 = vunpack.c.l.b16 %v782
    %v893 = vunpack.c.h.b16 %v782
    %v894 = vunpack.c.l.b16 %v783
    %v895 = vunpack.c.h.b16 %v783
    %v896 = vunpack.c.l.b16 %v784
    %v897 = vunpack.c.h.b16 %v784
    %v898 = vunpack.c.l.b16 %v785
    %v899 = vunpack.c.h.b16 %v785
    %v900 = vunpack.c.l.b16 %v786
    %v901 = vunpack.c.h.b16 %v786
    %v902 = vunpack.c.l.b16 %v787
    %v903 = vunpack.c.h.b16 %v787
    %v904 = vunpack.c.l.b16 %v788
    %v905 = vunpack.c.h.b16 %v788
    %v906 = vunpack.c.l.b16 %v789
    %v907 = vunpack.c.h.b16 %v789
    %v908 = vpack.c.b16 %v848, %v844
    %v909 = vpack.c.b16 %v849, %v845
    %v910 = vpack.c.b16 %v850, %v846
    %v911 = vpack.c.b16 %v851, %v847
    %v912 = vpack.c.b16 %v856, %v852
    %v913 = vpack.c.b16 %v857, %v853
    %v914 = vpack.c.b16 %v858, %v854
    %v915 = vpack.c.b16 %v859, %v855
    %v916 = vpack.c.b16 %v864, %v860
    %v917 = vpack.c.b16 %v865, %v861
    %v918 = vpack.c.b16 %v866, %v862
    %v919 = vpack.c.b16 %v867, %v863
    %v920 = vpack.c.b16 %v872, %v868
    %v921 = vpack.c.b16 %v873, %v869
    %v922 = vpack.c.b16 %v874, %v870
    %v923 = vpack.c.b16 %v875, %v871
    %v924 = vpack.c.b16 %v880, %v876
    %v925 = vpack.c.b16 %v881, %v877
    %v926 = vpack.c.b16 %v882, %v878
    %v927 = vpack.c.b16 %v883, %v879
    %v928 = vpack.c.b16 %v888, %v884
    %v929 = vpack.c.b16 %v889, %v885
    %v930 = vpack.c.b16 %v890, %v886
    %v931 = vpack.c.b16 %v891, %v887
    %v932 = vpack.c.b16 %v896, %v892
    %v933 = vpack.c.b16 %v897, %v893
    %v934 = vpack.c.b16 %v898, %v894
    %v935 = vpack.c.b16 %v899, %v895
    %v936 = vpack.c.b16 %v904, %v900
    %v937 = vpack.c.b16 %v905, %v901
    %v938 = vpack.c.b16 %v906, %v902
    %v939 = vpack.c.b16 %v907, %v903
    %972 = vmatprep.subr.bf16.mxu0 %v909
    %973 = vmatpush1.bf16.msra.mxu0 %v908
    %974 = vmatprep.subr.bf16.mxu0 %v913
    %975 = vmatpush1.bf16.msra.mxu0 %v912
    %976 = vmatprep.subr.bf16.mxu0 %v917
    %977 = vmatpush1.bf16.msra.mxu0 %v916
    %978 = vmatprep.subr.bf16.mxu0 %v921
    %979 = vmatpush1.bf16.msra.mxu0 %v920
    %980 = vmatprep.subr.bf16.mxu0 %v925
    %981 = vmatpush1.bf16.msra.mxu0 %v924
    %982 = vmatprep.subr.bf16.mxu0 %v929
    %983 = vmatpush1.bf16.msra.mxu0 %v928
    %984 = vmatprep.subr.bf16.mxu0 %v933
    %985 = vmatpush1.bf16.msra.mxu0 %v932
    %986 = vmatprep.subr.bf16.mxu0 %v937
    %987 = vmatpush1.bf16.msra.mxu0 %v936
    %988 = vmatprep.subr.bf16.mxu0 0
    %989 = vmatpush1.bf16.msra.mxu0 0
    %990 = vmatprep.subr.bf16.mxu0 0
    %991 = vmatpush1.bf16.msra.mxu0 0
    %992 = vmatprep.subr.bf16.mxu0 0
    %993 = vmatpush1.bf16.msra.mxu0 0
    %994 = vmatprep.subr.bf16.mxu0 0
    %995 = vmatpush1.bf16.msra.mxu0 0
    %996 = vmatprep.subr.bf16.mxu0 0
    %997 = vmatpush1.bf16.msra.mxu0 0
    %998 = vmatprep.subr.bf16.mxu0 0
    %999 = vmatpush1.bf16.msra.mxu0 0
    %1000 = vmatprep.subr.bf16.mxu0 0
    %1001 = vmatpush1.bf16.msra.mxu0 0
    %1002 = vmatprep.subr.bf16.mxu0 0
    %1003 = vmatpush1.bf16.msra.mxu0 0
    %1004 = vmatprep.mubr.bf16.mxu0 0
    %1005 = vmatmul.mubr.bf16.gmra.mrb[0].mxu0 %v757
    %v1006 = vpop.f32.mrb[0].mxu0
    %v1007 = vadd.f32 %v795, %v1006
    %v1008 = vpop.f32.mrb[0].mxu0
    %v1009 = vadd.f32 %v799, %v1008
    %v1010 = vpop.f32.mrb[0].mxu0
    %v1011 = vpop.f32.mrb[0].mxu0
    %1012 = vdwg.mxu0
    %1013 = vmatprep.subr.bf16.mxu0 %v911
    %1014 = vmatpush1.bf16.msra.mxu0 %v910
    %1015 = vmatprep.subr.bf16.mxu0 %v915
    %1016 = vmatpush1.bf16.msra.mxu0 %v914
    %1017 = vmatprep.subr.bf16.mxu0 %v919
    %1018 = vmatpush1.bf16.msra.mxu0 %v918
    %1019 = vmatprep.subr.bf16.mxu0 %v923
    %1020 = vmatpush1.bf16.msra.mxu0 %v922
    %1021 = vmatprep.subr.bf16.mxu0 %v927
    %1022 = vmatpush1.bf16.msra.mxu0 %v926
    %1023 = vmatprep.subr.bf16.mxu0 %v931
    %1024 = vmatpush1.bf16.msra.mxu0 %v930
    %1025 = vmatprep.subr.bf16.mxu0 %v935
    %1026 = vmatpush1.bf16.msra.mxu0 %v934
    %1027 = vmatprep.subr.bf16.mxu0 %v939
    %1028 = vmatpush1.bf16.msra.mxu0 %v938
    %1029 = vmatprep.subr.bf16.mxu0 0
    %1030 = vmatpush1.bf16.msra.mxu0 0
    %1031 = vmatprep.subr.bf16.mxu0 0
    %1032 = vmatpush1.bf16.msra.mxu0 0
    %1033 = vmatprep.subr.bf16.mxu0 0
    %1034 = vmatpush1.bf16.msra.mxu0 0
    %1035 = vmatprep.subr.bf16.mxu0 0
    %1036 = vmatpush1.bf16.msra.mxu0 0
    %1037 = vmatprep.subr.bf16.mxu0 0
    %1038 = vmatpush1.bf16.msra.mxu0 0
    %1039 = vmatprep.subr.bf16.mxu0 0
    %1040 = vmatpush1.bf16.msra.mxu0 0
    %1041 = vmatprep.subr.bf16.mxu0 0
    %1042 = vmatpush1.bf16.msra.mxu0 0
    %1043 = vmatprep.subr.bf16.mxu0 0
    %1044 = vmatpush1.bf16.msra.mxu0 0
    %1045 = vmatprep.mubr.bf16.mxu0 0
    %1046 = vmatmul.mubr.bf16.gmra.mrb[0].mxu0 %v757
    %v1047 = vpop.f32.mrb[0].mxu0
    %v1048 = vadd.f32 %v803, %v1047
    %v1049 = vpop.f32.mrb[0].mxu0
    %v1050 = vadd.f32 %v807, %v1049
    %v1051 = vpop.f32.mrb[0].mxu0
    %v1052 = vpop.f32.mrb[0].mxu0
    %1053 = vdwg.mxu0
    %v1054 = vtanh.pop %v1007
    %v1055 = vtanh.pop %v1009
    %v1056 = vtanh.pop %v1048
    %v1057 = vtanh.pop %v1050
    %v1058 = vadd.f32 %v1054, 1.0
    %v1059 = vadd.f32 %v1055, 1.0
    %v1060 = vadd.f32 %v1056, 1.0
    %v1061 = vadd.f32 %v1057, 1.0
    %v1062 = vmul.f32 %v1058, 0.5
    %v1063 = vmul.f32 %v1059, 0.5
    %v1064 = vmul.f32 %v1060, 0.5
    %v1065 = vmul.f32 %v1061, 0.5
    %1066 = vst [vmem:[#allocation8] sm:$0xff] %v1062
    %1067 = vst [vmem:[#allocation8 + $0x8] sm:$0xff] %v1063
    %1068 = vst [vmem:[#allocation8 + $0x10] sm:$0xff] %v1064
    %1069 = vst [vmem:[#allocation8 + $0x18] sm:$0xff] %v1065
    // Predicated region
    $region34: #{tpu_custom_call.1} parent=1 // pred_check
      _
    $region35: #{tpu_custom_call.1} parent=1 // pred_check_branch
      %1071 = sbr.rel (0) target = $region37
    $region36: #{tpu_custom_call.1} parent=1 // pred_region
      %s1073 = ssub.s32 512, 512
      %1074 = vsyncadd [#allocation4], %s1073
      %s1076 = sshll.u32 [#allocation8], 4
      %s1077 = int_to_ptr.vmem [resolvable:$true] %s1076
      %1079 = dma.vmem_to_hbm [thread:$0]  %s1077, 512, %s5, [#allocation4]
    $region37: #{tpu_custom_call.1} parent=1 // pred_fallthru
      _
    // Predicated region
    $region38: #{tpu_custom_call.1} parent=1 // pred_check
      _
    $region39: #{tpu_custom_call.1} parent=1 // pred_check_branch
      %1081 = sbr.rel (0) target = $region41
    $region40: #{tpu_custom_call.1} parent=1 // pred_region
      %1082 = dma.done [#allocation4], 512
    $region41: #{tpu_custom_call.1} parent=1 // pred_fallthru
      _
    %1083 = vsyncpa [#allocation3], 1
    %1084 = vsyncpa [#allocation6], 1
    %1085 = vsyncpa [#allocation4], 1

// kernel: tpu_custom_call.1
$region0: #{tpu_custom_call.1}
  #allocation0 [shape = 'u32[]', space=smem, size = 0x4, offset = 0x4, fixed_abs, tag = 'smem constant byte address 0x4 - core index']
  #allocation1 [shape = 'u32[144,128]{1,0:T(1,128)}', space=vmem, size = 0x12000, scoped, tag = 'internal scratch']
  %s0 = inlined_call_operand.hbm [shape: f32[8,1024], index: 0, kind: input, shape index: {}]
  %s1 = inlined_call_operand.hbm [shape: bf16[1024,128], index: 1, kind: input, shape index: {}]
  %s2 = inlined_call_operand.vmem [shape: f32[1,128], index: 2, kind: input, shape index: {}]
  %s3 = inlined_call_operand.hbm [shape: bf16[128,512], index: 3, kind: input, shape index: {}]
  %s4 = inlined_call_operand.vmem [shape: f32[1,512], index: 4, kind: input, shape index: {}]
  %s5 = inlined_call_operand.hbm [shape: f32[8,512], index: 5, kind: output, shape index: {}]
  %s6 = sld [smem:[#allocation0]]
  $region42: #{tpu_custom_call.1} parent=0
    _
  %s8 = ssub.s32 1, %s6
  %s9 = scalar_select 0, %s8, %s6
  $region1: #{tpu_custom_call.1} parent=0
    #allocation2 [shape = 'u8[32768]{0}', space=vmem, size = 0x8000, scoped, tag = 'input window, operand 0, single buffered']
    #allocation3 [shape = 's32[1]{0}', space=sflag, size = 0x4, scoped, tag = 'scoped memory for tpu_custom_call.1']
    #allocation4 [shape = 's32[1]{0}', space=sflag, size = 0x4, scoped, tag = 'scoped memory for tpu_custom_call.1']
    #allocation5 [shape = 'u8[262144]{0}', space=vmem, size = 0x40000, scoped, tag = 'input window, operand 1, single buffered']
    #allocation6 [shape = 's32[1]{0}', space=sflag, size = 0x4, scoped, tag = 'scoped memory for tpu_custom_call.1']
    #allocation7 [shape = 'u8[131072]{0}', space=vmem, size = 0x20000, scoped, tag = 'input window, operand 3, single buffered']
    #allocation8 [shape = 'u8[16384]{0}', space=vmem, size = 0x4000, scoped, tag = 'output window, operand 0, single buffered']
    %10 = vsyncpa [#allocation3], 0
    %11 = vsyncpa [#allocation6], 0
    %12 = vsyncpa [#allocation4], 0
    // Predicated region
    $region2: #{tpu_custom_call.1} parent=1 // pred_check
      _
    $region3: #{tpu_custom_call.1} parent=1 // pred_check_branch
      %14 = sbr.rel (0) target = $region5
    $region4: #{tpu_custom_call.1} parent=1 // pred_region
      %s16 = ssub.s32 1024, 1024
      %17 = vsyncadd [#allocation3], %s16
      %s19 = sshll.u32 [#allocation2], 4
      %s20 = int_to_ptr.vmem [resolvable:$true] %s19
      %22 = dma.hbm_to_vmem [thread:$0]  %s0, 1024, %s20, [#allocation3]
    $region5: #{tpu_custom_call.1} parent=1 // pred_fallthru
      _
    // Predicated region
    $region6: #{tpu_custom_call.1} parent=1 // pred_check
      _
    $region7: #{tpu_custom_call.1} parent=1 // pred_check_branch
      %24 = sbr.rel (0) target = $region9
    $region8: #{tpu_custom_call.1} parent=1 // pred_region
      %s26 = ssub.s32 8192, 8192
      %27 = vsyncadd [#allocation6], %s26
      %s28 = sshll.u32 [#allocation5], 4
      %s29 = int_to_ptr.vmem [resolvable:$true] %s28
      %34 = dma.hbm_to_vmem [thread:$0]  %s1, 8192, %s29, [#allocation6], 64, 64, 4
    $region9: #{tpu_custom_call.1} parent=1 // pred_fallthru
      _
    // Predicated region
    $region10: #{tpu_custom_call.1} parent=1 // pred_check
      _
    $region11: #{tpu_custom_call.1} parent=1 // pred_check_branch
      %36 = sbr.rel (0) target = $region13
    $region12: #{tpu_custom_call.1} parent=1 // pred_region
      _
    $region13: #{tpu_custom_call.1} parent=1 // pred_fallthru
      _
    // Predicated region
    $region14: #{tpu_custom_call.1} parent=1 // pred_check
      _
    $region15: #{tpu_custom_call.1} parent=1 // pred_check_branch
      %38 = sbr.rel (0) target = $region17
    $region16: #{tpu_custom_call.1} parent=1 // pred_region
      %s40 = ssub.s32 4096, 4096
      %41 = vsyncadd [#allocation6], %s40
      %s42 = sshll.u32 [#allocation7], 4
      %s43 = int_to_ptr.vmem [resolvable:$true] %s42
      %48 = dma.hbm_to_vmem [thread:$0]  %s3, 4096, %s43, [#allocation6], 256, 256, 16
    $region17: #{tpu_custom_call.1} parent=1 // pred_fallthru
      _
    // Predicated region
    $region18: #{tpu_custom_call.1} parent=1 // pred_check
      _
    $region19: #{tpu_custom_call.1} parent=1 // pred_check_branch
      %50 = sbr.rel (0) target = $region21
    $region20: #{tpu_custom_call.1} parent=1 // pred_region
      _
    $region21: #{tpu_custom_call.1} parent=1 // pred_fallthru
      _
    // Predicated region
    $region22: #{tpu_custom_call.1} parent=1 // pred_check
      _
    $region23: #{tpu_custom_call.1} parent=1 // pred_check_branch
      %52 = sbr.rel (0) target = $region25
    $region24: #{tpu_custom_call.1} parent=1 // pred_region
      %53 = dma.done [#allocation3], 1024
    $region25: #{tpu_custom_call.1} parent=1 // pred_fallthru
      _
    // Predicated region
    $region26: #{tpu_custom_call.1} parent=1 // pred_check
      _
    $region27: #{tpu_custom_call.1} parent=1 // pred_check_branch
      %55 = sbr.rel (0) target = $region29
    $region28: #{tpu_custom_call.1} parent=1 // pred_region
      %56 = dma.done [#allocation6], 8192
    $region29: #{tpu_custom_call.1} parent=1 // pred_fallthru
      _
    // Predicated region
    $region30: #{tpu_custom_call.1} parent=1 // pred_check
      _
    $region31: #{tpu_custom_call.1} parent=1 // pred_check_branch
      %58 = sbr.rel (0) target = $region33
    $region32: #{tpu_custom_call.1} parent=1 // pred_region
      %59 = dma.done [#allocation6], 4096
    $region33: #{tpu_custom_call.1} parent=1 // pred_fallthru
      _
    %v61 = vld [vmem:[#allocation2] sm:$0xff]
    %v62 = vld [vmem:[#allocation2 + $0x8] sm:$0xff]
    %v63 = vld [vmem:[#allocation2 + $0x10] sm:$0xff]
    %v64 = vld [vmem:[#allocation2 + $0x18] sm:$0xff]
    %v65 = vld [vmem:[#allocation2 + $0x20] sm:$0xff]
    %v66 = vld [vmem:[#allocation2 + $0x28] sm:$0xff]
    %v67 = vld [vmem:[#allocation2 + $0x30] sm:$0xff]
    %v68 = vld [vmem:[#allocation2 + $0x38] sm:$0xff]
    %v69 = vpack.c.bf16 %v61, %v61
    %v70 = vpack.c.bf16 %v62, %v62
    %v71 = vpack.c.bf16 %v63, %v63
    %v72 = vpack.c.bf16 %v64, %v64
    %v73 = vpack.c.bf16 %v65, %v65
    %v74 = vpack.c.bf16 %v66, %v66
    %v75 = vpack.c.bf16 %v67, %v67
    %v76 = vpack.c.bf16 %v68, %v68
    %v77 = vld [vmem:[#allocation5] sm:$0xf]
    %v78 = vld [vmem:[#allocation5 + $0x4] sm:$0xf]
    %v79 = vld [vmem:[#allocation5 + $0x8] sm:$0xf]
    %v80 = vld [vmem:[#allocation5 + $0xc] sm:$0xf]
    %v81 = vld [vmem:[#allocation5 + $0x10] sm:$0xf]
    %v82 = vld [vmem:[#allocation5 + $0x14] sm:$0xf]
    %v83 = vld [vmem:[#allocation5 + $0x18] sm:$0xf]
    %v84 = vld [vmem:[#allocation5 + $0x1c] sm:$0xf]
    %v85 = vld [vmem:[#allocation5 + $0x20] sm:$0xf]
    %v86 = vld [vmem:[#allocation5 + $0x24] sm:$0xf]
    %v87 = vld [vmem:[#allocation5 + $0x28] sm:$0xf]
    %v88 = vld [vmem:[#allocation5 + $0x2c] sm:$0xf]
    %v89 = vld [vmem:[#allocation5 + $0x30] sm:$0xf]
    %v90 = vld [vmem:[#allocation5 + $0x34] sm:$0xf]
    %v91 = vld [vmem:[#allocation5 + $0x38] sm:$0xf]
    %v92 = vld [vmem:[#allocation5 + $0x3c] sm:$0xf]
    %v93 = vld [vmem:[#allocation5 + $0x40] sm:$0xf]
    %v94 = vld [vmem:[#allocation5 + $0x44] sm:$0xf]
    %v95 = vld [vmem:[#allocation5 + $0x48] sm:$0xf]
    %v96 = vld [vmem:[#allocation5 + $0x4c] sm:$0xf]
    %v97 = vld [vmem:[#allocation5 + $0x50] sm:$0xf]
    %v98 = vld [vmem:[#allocation5 + $0x54] sm:$0xf]
    %v99 = vld [vmem:[#allocation5 + $0x58] sm:$0xf]
    %v100 = vld [vmem:[#allocation5 + $0x5c] sm:$0xf]
    %v101 = vld [vmem:[#allocation5 + $0x60] sm:$0xf]
    %v102 = vld [vmem:[#allocation5 + $0x64] sm:$0xf]
    %v103 = vld [vmem:[#allocation5 + $0x68] sm:$0xf]
    %v104 = vld [vmem:[#allocation5 + $0x6c] sm:$0xf]
    %v105 = vld [vmem:[#allocation5 + $0x70] sm:$0xf]
    %v106 = vld [vmem:[#allocation5 + $0x74] sm:$0xf]
    %v107 = vld [vmem:[#allocation5 + $0x78] sm:$0xf]
    %v108 = vld [vmem:[#allocation5 + $0x7c] sm:$0xf]
    %v109 = vld [vmem:[#allocation5 + $0x80] sm:$0xf]
    %v110 = vld [vmem:[#allocation5 + $0x84] sm:$0xf]
    %v111 = vld [vmem:[#allocation5 + $0x88] sm:$0xf]
    %v112 = vld [vmem:[#allocation5 + $0x8c] sm:$0xf]
    %v113 = vld [vmem:[#allocation5 + $0x90] sm:$0xf]
    %v114 = vld [vmem:[#allocation5 + $0x94] sm:$0xf]
    %v115 = vld [vmem:[#allocation5 + $0x98] sm:$0xf]
    %v116 = vld [vmem:[#allocation5 + $0x9c] sm:$0xf]
    %v117 = vld [vmem:[#allocation5 + $0xa0] sm:$0xf]
    %v118 = vld [vmem:[#allocation5 + $0xa4] sm:$0xf]
    %v119 = vld [vmem:[#allocation5 + $0xa8] sm:$0xf]
    %v120 = vld [vmem:[#allocation5 + $0xac] sm:$0xf]
    %v121 = vld [vmem:[#allocation5 + $0xb0] sm:$0xf]
    %v122 = vld [vmem:[#allocation5 + $0xb4] sm:$0xf]
    %v123 = vld [vmem:[#allocation5 + $0xb8] sm:$0xf]
    %v124 = vld [vmem:[#allocation5 + $0xbc] sm:$0xf]
    %v125 = vld [vmem:[#allocation5 + $0xc0] sm:$0xf]
    %v126 = vld [vmem:[#allocation5 + $0xc4] sm:$0xf]
    %v127 = vld [vmem:[#allocation5 + $0xc8] sm:$0xf]
    %v128 = vld [vmem:[#allocation5 + $0xcc] sm:$0xf]
    %v129 = vld [vmem:[#allocation5 + $0xd0] sm:$0xf]
    %v130 = vld [vmem:[#allocation5 + $0xd4] sm:$0xf]
    %v131 = vld [vmem:[#allocation5 + $0xd8] sm:$0xf]
    %v132 = vld [vmem:[#allocation5 + $0xdc] sm:$0xf]
    %v133 = vld [vmem:[#allocation5 + $0xe0] sm:$0xf]
    %v134 = vld [vmem:[#allocation5 + $0xe4] sm:$0xf]
    %v135 = vld [vmem:[#allocation5 + $0xe8] sm:$0xf]
    %v136 = vld [vmem:[#allocation5 + $0xec] sm:$0xf]
    %v137 = vld [vmem:[#allocation5 + $0xf0] sm:$0xf]
    %v138 = vld [vmem:[#allocation5 + $0xf4] sm:$0xf]
    %v139 = vld [vmem:[#allocation5 + $0xf8] sm:$0xf]
    %v140 = vld [vmem:[#allocation5 + $0xfc] sm:$0xf]
    %v141 = vld [vmem:[#allocation5 + $0x100] sm:$0xf]
    %v142 = vld [vmem:[#allocation5 + $0x104] sm:$0xf]
    %v143 = vld [vmem:[#allocation5 + $0x108] sm:$0xf]
    %v144 = vld [vmem:[#allocation5 + $0x10c] sm:$0xf]
    %v145 = vld [vmem:[#allocation5 + $0x110] sm:$0xf]
    %v146 = vld [vmem:[#allocation5 + $0x114] sm:$0xf]
    %v147 = vld [vmem:[#allocation5 + $0x118] sm:$0xf]
    %v148 = vld [vmem:[#allocation5 + $0x11c] sm:$0xf]
    %v149 = vld [vmem:[#allocation5 + $0x120] sm:$0xf]
    %v150 = vld [vmem:[#allocation5 + $0x124] sm:$0xf]
    %v151 = vld [vmem:[#allocation5 + $0x128] sm:$0xf]
    %v152 = vld [vmem:[#allocation5 + $0x12c] sm:$0xf]
    %v153 = vld [vmem:[#allocation5 + $0x130] sm:$0xf]
    %v154 = vld [vmem:[#allocation5 + $0x134] sm:$0xf]
    %v155 = vld [vmem:[#allocation5 + $0x138] sm:$0xf]
    %v156 = vld [vmem:[#allocation5 + $0x13c] sm:$0xf]
    %v157 = vld [vmem:[#allocation5 + $0x140] sm:$0xf]
    %v158 = vld [vmem:[#allocation5 + $0x144] sm:$0xf]
    %v159 = vld [vmem:[#allocation5 + $0x148] sm:$0xf]
    %v160 = vld [vmem:[#allocation5 + $0x14c] sm:$0xf]
    %v161 = vld [vmem:[#allocation5 + $0x150] sm:$0xf]
    %v162 = vld [vmem:[#allocation5 + $0x154] sm:$0xf]
    %v163 = vld [vmem:[#allocation5 + $0x158] sm:$0xf]
    %v164 = vld [vmem:[#allocation5 + $0x15c] sm:$0xf]
    %v165 = vld [vmem:[#allocation5 + $0x160] sm:$0xf]
    %v166 = vld [vmem:[#allocation5 + $0x164] sm:$0xf]
    %v167 = vld [vmem:[#allocation5 + $0x168] sm:$0xf]
    %v168 = vld [vmem:[#allocation5 + $0x16c] sm:$0xf]
    %v169 = vld [vmem:[#allocation5 + $0x170] sm:$0xf]
    %v170 = vld [vmem:[#allocation5 + $0x174] sm:$0xf]
    %v171 = vld [vmem:[#allocation5 + $0x178] sm:$0xf]
    %v172 = vld [vmem:[#allocation5 + $0x17c] sm:$0xf]
    %v173 = vld [vmem:[#allocation5 + $0x180] sm:$0xf]
    %v174 = vld [vmem:[#allocation5 + $0x184] sm:$0xf]
    %v175 = vld [vmem:[#allocation5 + $0x188] sm:$0xf]
    %v176 = vld [vmem:[#allocation5 + $0x18c] sm:$0xf]
    %v177 = vld [vmem:[#allocation5 + $0x190] sm:$0xf]
    %v178 = vld [vmem:[#allocation5 + $0x194] sm:$0xf]
    %v179 = vld [vmem:[#allocation5 + $0x198] sm:$0xf]
    %v180 = vld [vmem:[#allocation5 + $0x19c] sm:$0xf]
    %v181 = vld [vmem:[#allocation5 + $0x1a0] sm:$0xf]
    %v182 = vld [vmem:[#allocation5 + $0x1a4] sm:$0xf]
    %v183 = vld [vmem:[#allocation5 + $0x1a8] sm:$0xf]
    %v184 = vld [vmem:[#allocation5 + $0x1ac] sm:$0xf]
    %v185 = vld [vmem:[#allocation5 + $0x1b0] sm:$0xf]
    %v186 = vld [vmem:[#allocation5 + $0x1b4] sm:$0xf]
    %v187 = vld [vmem:[#allocation5 + $0x1b8] sm:$0xf]
    %v188 = vld [vmem:[#allocation5 + $0x1bc] sm:$0xf]
    %v189 = vld [vmem:[#allocation5 + $0x1c0] sm:$0xf]
    %v190 = vld [vmem:[#allocation5 + $0x1c4] sm:$0xf]
    %v191 = vld [vmem:[#allocation5 + $0x1c8] sm:$0xf]
    %v192 = vld [vmem:[#allocation5 + $0x1cc] sm:$0xf]
    %v193 = vld [vmem:[#allocation5 + $0x1d0] sm:$0xf]
    %v194 = vld [vmem:[#allocation5 + $0x1d4] sm:$0xf]
    %v195 = vld [vmem:[#allocation5 + $0x1d8] sm:$0xf]
    %v196 = vld [vmem:[#allocation5 + $0x1dc] sm:$0xf]
    %v197 = vld [vmem:[#allocation5 + $0x1e0] sm:$0xf]
    %v198 = vld [vmem:[#allocation5 + $0x1e4] sm:$0xf]
    %v199 = vld [vmem:[#allocation5 + $0x1e8] sm:$0xf]
    %v200 = vld [vmem:[#allocation5 + $0x1ec] sm:$0xf]
    %v201 = vld [vmem:[#allocation5 + $0x1f0] sm:$0xf]
    %v202 = vld [vmem:[#allocation5 + $0x1f4] sm:$0xf]
    %v203 = vld [vmem:[#allocation5 + $0x1f8] sm:$0xf]
    %v204 = vld [vmem:[#allocation5 + $0x1fc] sm:$0xf]
    %v205 = vld [vmem:[%s2] sm:$0x1]
    %v207 = vlaneseq
    %v208 = vshrl.u32 %v207, 7
    %v209 = vsub.s32 0, %v208
    %v210 = vrot.slane %v205, %v209
    %v340 = vunpack.c.l.b16 %v77
    %v341 = vunpack.c.l.b16 %v78
    %v342 = vunpack.c.l.b16 %v79
    %v343 = vunpack.c.l.b16 %v80
    %v344 = vunpack.c.l.b16 %v81
    %v345 = vunpack.c.l.b16 %v82
    %v346 = vunpack.c.l.b16 %v83
    %v347 = vunpack.c.l.b16 %v84
    %v348 = vunpack.c.l.b16 %v85
    %v349 = vunpack.c.l.b16 %v86
    %v350 = vunpack.c.l.b16 %v87
    %v351 = vunpack.c.l.b16 %v88
    %v352 = vunpack.c.l.b16 %v89
    %v353 = vunpack.c.l.b16 %v90
    %v354 = vunpack.c.l.b16 %v91
    %v355 = vunpack.c.l.b16 %v92
    %v356 = vunpack.c.l.b16 %v93
    %v357 = vunpack.c.l.b16 %v94
    %v358 = vunpack.c.l.b16 %v95
    %v359 = vunpack.c.l.b16 %v96
    %v360 = vunpack.c.l.b16 %v97
    %v361 = vunpack.c.l.b16 %v98
    %v362 = vunpack.c.l.b16 %v99
    %v363 = vunpack.c.l.b16 %v100
    %v364 = vunpack.c.l.b16 %v101
    %v365 = vunpack.c.l.b16 %v102
    %v366 = vunpack.c.l.b16 %v103
    %v367 = vunpack.c.l.b16 %v104
    %v368 = vunpack.c.l.b16 %v105
    %v369 = vunpack.c.l.b16 %v106
    %v370 = vunpack.c.l.b16 %v107
    %v371 = vunpack.c.l.b16 %v108
    %v372 = vunpack.c.l.b16 %v109
    %v373 = vunpack.c.l.b16 %v110
    %v374 = vunpack.c.l.b16 %v111
    %v375 = vunpack.c.l.b16 %v112
    %v376 = vunpack.c.l.b16 %v113
    %v377 = vunpack.c.l.b16 %v114
    %v378 = vunpack.c.l.b16 %v115
    %v379 = vunpack.c.l.b16 %v116
    %v380 = vunpack.c.l.b16 %v117
    %v381 = vunpack.c.l.b16 %v118
    %v382 = vunpack.c.l.b16 %v119
    %v383 = vunpack.c.l.b16 %v120
    %v384 = vunpack.c.l.b16 %v121
    %v385 = vunpack.c.l.b16 %v122
    %v386 = vunpack.c.l.b16 %v123
    %v387 = vunpack.c.l.b16 %v124
    %v388 = vunpack.c.l.b16 %v125
    %v389 = vunpack.c.l.b16 %v126
    %v390 = vunpack.c.l.b16 %v127
    %v391 = vunpack.c.l.b16 %v128
    %v392 = vunpack.c.l.b16 %v129
    %v393 = vunpack.c.l.b16 %v130
    %v394 = vunpack.c.l.b16 %v131
    %v395 = vunpack.c.l.b16 %v132
    %v396 = vunpack.c.l.b16 %v133
    %v397 = vunpack.c.l.b16 %v134
    %v398 = vunpack.c.l.b16 %v135
    %v399 = vunpack.c.l.b16 %v136
    %v400 = vunpack.c.l.b16 %v137
    %v401 = vunpack.c.l.b16 %v138
    %v402 = vunpack.c.l.b16 %v139
    %v403 = vunpack.c.l.b16 %v140
    %v404 = vunpack.c.l.b16 %v141
    %v405 = vunpack.c.l.b16 %v142
    %v406 = vunpack.c.l.b16 %v143
    %v407 = vunpack.c.l.b16 %v144
    %v408 = vunpack.c.l.b16 %v145
    %v409 = vunpack.c.l.b16 %v146
    %v410 = vunpack.c.l.b16 %v147
    %v411 = vunpack.c.l.b16 %v148
    %v412 = vunpack.c.l.b16 %v149
    %v413 = vunpack.c.l.b16 %v150
    %v414 = vunpack.c.l.b16 %v151
    %v415 = vunpack.c.l.b16 %v152
    %v416 = vunpack.c.l.b16 %v153
    %v417 = vunpack.c.l.b16 %v154
    %v418 = vunpack.c.l.b16 %v155
    %v419 = vunpack.c.l.b16 %v156
    %v420 = vunpack.c.l.b16 %v157
    %v421 = vunpack.c.l.b16 %v158
    %v422 = vunpack.c.l.b16 %v159
    %v423 = vunpack.c.l.b16 %v160
    %v424 = vunpack.c.l.b16 %v161
    %v425 = vunpack.c.l.b16 %v162
    %v426 = vunpack.c.l.b16 %v163
    %v427 = vunpack.c.l.b16 %v164
    %v428 = vunpack.c.l.b16 %v165
    %v429 = vunpack.c.l.b16 %v166
    %v430 = vunpack.c.l.b16 %v167
    %v431 = vunpack.c.l.b16 %v168
    %v432 = vunpack.c.l.b16 %v169
    %v433 = vunpack.c.l.b16 %v170
    %v434 = vunpack.c.l.b16 %v171
    %v435 = vunpack.c.l.b16 %v172
    %v436 = vunpack.c.l.b16 %v173
    %v437 = vunpack.c.l.b16 %v174
    %v438 = vunpack.c.l.b16 %v175
    %v439 = vunpack.c.l.b16 %v176
    %v440 = vunpack.c.l.b16 %v177
    %v441 = vunpack.c.l.b16 %v178
    %v442 = vunpack.c.l.b16 %v179
    %v443 = vunpack.c.l.b16 %v180
    %v444 = vunpack.c.l.b16 %v181
    %v445 = vunpack.c.l.b16 %v182
    %v446 = vunpack.c.l.b16 %v183
    %v447 = vunpack.c.l.b16 %v184
    %v448 = vunpack.c.l.b16 %v185
    %v449 = vunpack.c.l.b16 %v186
    %v450 = vunpack.c.l.b16 %v187
    %v451 = vunpack.c.l.b16 %v188
    %v452 = vunpack.c.l.b16 %v189
    %v453 = vunpack.c.l.b16 %v190
    %v454 = vunpack.c.l.b16 %v191
    %v455 = vunpack.c.l.b16 %v192
    %v456 = vunpack.c.l.b16 %v193
    %v457 = vunpack.c.l.b16 %v194
    %v458 = vunpack.c.l.b16 %v195
    %v459 = vunpack.c.l.b16 %v196
    %v460 = vunpack.c.l.b16 %v197
    %v461 = vunpack.c.l.b16 %v198
    %v462 = vunpack.c.l.b16 %v199
    %v463 = vunpack.c.l.b16 %v200
    %v464 = vunpack.c.l.b16 %v201
    %v465 = vunpack.c.l.b16 %v202
    %v466 = vunpack.c.l.b16 %v203
    %v467 = vunpack.c.l.b16 %v204
    %v468 = vpack.c.b16 %v341, %v340
    %v469 = vpack.c.b16 %v343, %v342
    %v470 = vpack.c.b16 %v345, %v344
    %v471 = vpack.c.b16 %v347, %v346
    %v472 = vpack.c.b16 %v349, %v348
    %v473 = vpack.c.b16 %v351, %v350
    %v474 = vpack.c.b16 %v353, %v352
    %v475 = vpack.c.b16 %v355, %v354
    %v476 = vpack.c.b16 %v357, %v356
    %v477 = vpack.c.b16 %v359, %v358
    %v478 = vpack.c.b16 %v361, %v360
    %v479 = vpack.c.b16 %v363, %v362
    %v480 = vpack.c.b16 %v365, %v364
    %v481 = vpack.c.b16 %v367, %v366
    %v482 = vpack.c.b16 %v369, %v368
    %v483 = vpack.c.b16 %v371, %v370
    %v484 = vpack.c.b16 %v373, %v372
    %v485 = vpack.c.b16 %v375, %v374
    %v486 = vpack.c.b16 %v377, %v376
    %v487 = vpack.c.b16 %v379, %v378
    %v488 = vpack.c.b16 %v381, %v380
    %v489 = vpack.c.b16 %v383, %v382
    %v490 = vpack.c.b16 %v385, %v384
    %v491 = vpack.c.b16 %v387, %v386
    %v492 = vpack.c.b16 %v389, %v388
    %v493 = vpack.c.b16 %v391, %v390
    %v494 = vpack.c.b16 %v393, %v392
    %v495 = vpack.c.b16 %v395, %v394
    %v496 = vpack.c.b16 %v397, %v396
    %v497 = vpack.c.b16 %v399, %v398
    %v498 = vpack.c.b16 %v401, %v400
    %v499 = vpack.c.b16 %v403, %v402
    %v500 = vpack.c.b16 %v405, %v404
    %v501 = vpack.c.b16 %v407, %v406
    %v502 = vpack.c.b16 %v409, %v408
    %v503 = vpack.c.b16 %v411, %v410
    %v504 = vpack.c.b16 %v413, %v412
    %v505 = vpack.c.b16 %v415, %v414
    %v506 = vpack.c.b16 %v417, %v416
    %v507 = vpack.c.b16 %v419, %v418
    %v508 = vpack.c.b16 %v421, %v420
    %v509 = vpack.c.b16 %v423, %v422
    %v510 = vpack.c.b16 %v425, %v424
    %v511 = vpack.c.b16 %v427, %v426
    %v512 = vpack.c.b16 %v429, %v428
    %v513 = vpack.c.b16 %v431, %v430
    %v514 = vpack.c.b16 %v433, %v432
    %v515 = vpack.c.b16 %v435, %v434
    %v516 = vpack.c.b16 %v437, %v436
    %v517 = vpack.c.b16 %v439, %v438
    %v518 = vpack.c.b16 %v441, %v440
    %v519 = vpack.c.b16 %v443, %v442
    %v520 = vpack.c.b16 %v445, %v444
    %v521 = vpack.c.b16 %v447, %v446
    %v522 = vpack.c.b16 %v449, %v448
    %v523 = vpack.c.b16 %v451, %v450
    %v524 = vpack.c.b16 %v453, %v452
    %v525 = vpack.c.b16 %v455, %v454
    %v526 = vpack.c.b16 %v457, %v456
    %v527 = vpack.c.b16 %v459, %v458
    %v528 = vpack.c.b16 %v461, %v460
    %v529 = vpack.c.b16 %v463, %v462
    %v530 = vpack.c.b16 %v465, %v464
    %v531 = vpack.c.b16 %v467, %v466
    %596 = vmatprep.subr.bf16.mxu0 0
    %597 = vmatpush1.bf16.msra.mxu0 %v468
    %598 = vmatprep.subr.bf16.mxu0 0
    %599 = vmatpush1.bf16.msra.mxu0 %v469
    %600 = vmatprep.subr.bf16.mxu0 0
    %601 = vmatpush1.bf16.msra.mxu0 %v470
    %602 = vmatprep.subr.bf16.mxu0 0
    %603 = vmatpush1.bf16.msra.mxu0 %v471
    %604 = vmatprep.subr.bf16.mxu0 0
    %605 = vmatpush1.bf16.msra.mxu0 %v472
    %606 = vmatprep.subr.bf16.mxu0 0
    %607 = vmatpush1.bf16.msra.mxu0 %v473
    %608 = vmatprep.subr.bf16.mxu0 0
    %609 = vmatpush1.bf16.msra.mxu0 %v474
    %610 = vmatprep.subr.bf16.mxu0 0
    %611 = vmatpush1.bf16.msra.mxu0 %v475
    %612 = vmatprep.subr.bf16.mxu0 0
    %613 = vmatpush1.bf16.msra.mxu0 %v476
    %614 = vmatprep.subr.bf16.mxu0 0
    %615 = vmatpush1.bf16.msra.mxu0 %v477
    %616 = vmatprep.subr.bf16.mxu0 0
    %617 = vmatpush1.bf16.msra.mxu0 %v478
    %618 = vmatprep.subr.bf16.mxu0 0
    %619 = vmatpush1.bf16.msra.mxu0 %v479
    %620 = vmatprep.subr.bf16.mxu0 0
    %621 = vmatpush1.bf16.msra.mxu0 %v480
    %622 = vmatprep.subr.bf16.mxu0 0
    %623 = vmatpush1.bf16.msra.mxu0 %v481
    %624 = vmatprep.subr.bf16.mxu0 0
    %625 = vmatpush1.bf16.msra.mxu0 %v482
    %626 = vmatprep.subr.bf16.mxu0 0
    %627 = vmatpush1.bf16.msra.mxu0 %v483
    %628 = vmatprep.mubr.bf16.mxu0 %v70
    %629 = vmatmul.mubr.bf16.gmra.mrb[0].mxu0 %v69
    %v630 = vpop.f32.mrb[0].mxu0
    %v631 = vadd.f32 %v210, %v630
    %v632 = vpop.f32.mrb[0].mxu0
    %v633 = vpop.f32.mrb[0].mxu0
    %v634 = vpop.f32.mrb[0].mxu0
    %635 = vdwg.mxu0
    %636 = vmatprep.subr.bf16.mxu0 0
    %637 = vmatpush1.bf16.msra.mxu0 %v484
    %638 = vmatprep.subr.bf16.mxu0 0
    %639 = vmatpush1.bf16.msra.mxu0 %v485
    %640 = vmatprep.subr.bf16.mxu0 0
    %641 = vmatpush1.bf16.msra.mxu0 %v486
    %642 = vmatprep.subr.bf16.mxu0 0
    %643 = vmatpush1.bf16.msra.mxu0 %v487
    %644 = vmatprep.subr.bf16.mxu0 0
    %645 = vmatpush1.bf16.msra.mxu0 %v488
    %646 = vmatprep.subr.bf16.mxu0 0
    %647 = vmatpush1.bf16.msra.mxu0 %v489
    %648 = vmatprep.subr.bf16.mxu0 0
    %649 = vmatpush1.bf16.msra.mxu0 %v490
    %650 = vmatprep.subr.bf16.mxu0 0
    %651 = vmatpush1.bf16.msra.mxu0 %v491
    %652 = vmatprep.subr.bf16.mxu0 0
    %653 = vmatpush1.bf16.msra.mxu0 %v492
    %654 = vmatprep.subr.bf16.mxu0 0
    %655 = vmatpush1.bf16.msra.mxu0 %v493
    %656 = vmatprep.subr.bf16.mxu0 0
    %657 = vmatpush1.bf16.msra.mxu0 %v494
    %658 = vmatprep.subr.bf16.mxu0 0
    %659 = vmatpush1.bf16.msra.mxu0 %v495
    %660 = vmatprep.subr.bf16.mxu0 0
    %661 = vmatpush1.bf16.msra.mxu0 %v496
    %662 = vmatprep.subr.bf16.mxu0 0
    %663 = vmatpush1.bf16.msra.mxu0 %v497
    %664 = vmatprep.subr.bf16.mxu0 0
    %665 = vmatpush1.bf16.msra.mxu0 %v498
    %666 = vmatprep.subr.bf16.mxu0 0
    %667 = vmatpush1.bf16.msra.mxu0 %v499
    %668 = vmatprep.mubr.bf16.mxu0 %v72
    %669 = vmatmul.mubr.bf16.gmra.mrb[0].mxu0 %v71
    %v670 = vpop.f32.mrb[0].mxu0
    %v671 = vadd.f32 %v631, %v670
    %v672 = vpop.f32.mrb[0].mxu0
    %v673 = vpop.f32.mrb[0].mxu0
    %v674 = vpop.f32.mrb[0].mxu0
    %675 = vdwg.mxu0
    %676 = vmatprep.subr.bf16.mxu0 0
    %677 = vmatpush1.bf16.msra.mxu0 %v500
    %678 = vmatprep.subr.bf16.mxu0 0
    %679 = vmatpush1.bf16.msra.mxu0 %v501
    %680 = vmatprep.subr.bf16.mxu0 0
    %681 = vmatpush1.bf16.msra.mxu0 %v502
    %682 = vmatprep.subr.bf16.mxu0 0
    %683 = vmatpush1.bf16.msra.mxu0 %v503
    %684 = vmatprep.subr.bf16.mxu0 0
    %685 = vmatpush1.bf16.msra.mxu0 %v504
    %686 = vmatprep.subr.bf16.mxu0 0
    %687 = vmatpush1.bf16.msra.mxu0 %v505
    %688 = vmatprep.subr.bf16.mxu0 0
    %689 = vmatpush1.bf16.msra.mxu0 %v506
    %690 = vmatprep.subr.bf16.mxu0 0
    %691 = vmatpush1.bf16.msra.mxu0 %v507
    %692 = vmatprep.subr.bf16.mxu0 0
    %693 = vmatpush1.bf16.msra.mxu0 %v508
    %694 = vmatprep.subr.bf16.mxu0 0
    %695 = vmatpush1.bf16.msra.mxu0 %v509
    %696 = vmatprep.subr.bf16.mxu0 0
    %697 = vmatpush1.bf16.msra.mxu0 %v510
    %698 = vmatprep.subr.bf16.mxu0 0
    %699 = vmatpush1.bf16.msra.mxu0 %v511
    %700 = vmatprep.subr.bf16.mxu0 0
    %701 = vmatpush1.bf16.msra.mxu0 %v512
    %702 = vmatprep.subr.bf16.mxu0 0
    %703 = vmatpush1.bf16.msra.mxu0 %v513
    %704 = vmatprep.subr.bf16.mxu0 0
    %705 = vmatpush1.bf16.msra.mxu0 %v514
    %706 = vmatprep.subr.bf16.mxu0 0
    %707 = vmatpush1.bf16.msra.mxu0 %v515
    %708 = vmatprep.mubr.bf16.mxu0 %v74
    %709 = vmatmul.mubr.bf16.gmra.mrb[0].mxu0 %v73
    %v710 = vpop.f32.mrb[0].mxu0
    %v711 = vadd.f32 %v671, %v710
    %v712 = vpop.f32.mrb[0].mxu0
    %v713 = vpop.f32.mrb[0].mxu0
    %v714 = vpop.f32.mrb[0].mxu0
    %715 = vdwg.mxu0
    %716 = vmatprep.subr.bf16.mxu0 0
    %717 = vmatpush1.bf16.msra.mxu0 %v516
    %718 = vmatprep.subr.bf16.mxu0 0
    %719 = vmatpush1.bf16.msra.mxu0 %v517
    %720 = vmatprep.subr.bf16.mxu0 0
    %721 = vmatpush1.bf16.msra.mxu0 %v518
    %722 = vmatprep.subr.bf16.mxu0 0
    %723 = vmatpush1.bf16.msra.mxu0 %v519
    %724 = vmatprep.subr.bf16.mxu0 0
    %725 = vmatpush1.bf16.msra.mxu0 %v520
    %726 = vmatprep.subr.bf16.mxu0 0
    %727 = vmatpush1.bf16.msra.mxu0 %v521
    %728 = vmatprep.subr.bf16.mxu0 0
    %729 = vmatpush1.bf16.msra.mxu0 %v522
    %730 = vmatprep.subr.bf16.mxu0 0
    %731 = vmatpush1.bf16.msra.mxu0 %v523
    %732 = vmatprep.subr.bf16.mxu0 0
    %733 = vmatpush1.bf16.msra.mxu0 %v524
    %734 = vmatprep.subr.bf16.mxu0 0
    %735 = vmatpush1.bf16.msra.mxu0 %v525
    %736 = vmatprep.subr.bf16.mxu0 0
    %737 = vmatpush1.bf16.msra.mxu0 %v526
    %738 = vmatprep.subr.bf16.mxu0 0
    %739 = vmatpush1.bf16.msra.mxu0 %v527
    %740 = vmatprep.subr.bf16.mxu0 0
    %741 = vmatpush1.bf16.msra.mxu0 %v528
    %742 = vmatprep.subr.bf16.mxu0 0
    %743 = vmatpush1.bf16.msra.mxu0 %v529
    %744 = vmatprep.subr.bf16.mxu0 0
    %745 = vmatpush1.bf16.msra.mxu0 %v530
    %746 = vmatprep.subr.bf16.mxu0 0
    %747 = vmatpush1.bf16.msra.mxu0 %v531
    %748 = vmatprep.mubr.bf16.mxu0 %v76
    %749 = vmatmul.mubr.bf16.gmra.mrb[0].mxu0 %v75
    %v750 = vpop.f32.mrb[0].mxu0
    %v751 = vadd.f32 %v711, %v750
    %v752 = vpop.f32.mrb[0].mxu0
    %v753 = vpop.f32.mrb[0].mxu0
    %v754 = vpop.f32.mrb[0].mxu0
    %755 = vdwg.mxu0
    %v756 = vmax.f32 %v751, 0.0
    %v757 = vpack.c.bf16 %v756, %v756
    %v758 = vld [vmem:[#allocation7] sm:$0xff]
    %v759 = vld [vmem:[#allocation7 + $0x8] sm:$0xff]
    %v760 = vld [vmem:[#allocation7 + $0x10] sm:$0xff]
    %v761 = vld [vmem:[#allocation7 + $0x18] sm:$0xff]
    %v762 = vld [vmem:[#allocation7 + $0x20] sm:$0xff]
    %v763 = vld [vmem:[#allocation7 + $0x28] sm:$0xff]
    %v764 = vld [vmem:[#allocation7 + $0x30] sm:$0xff]
    %v765 = vld [vmem:[#allocation7 + $0x38] sm:$0xff]
    %v766 = vld [vmem:[#allocation7 + $0x40] sm:$0xff]
    %v767 = vld [vmem:[#allocation7 + $0x48] sm:$0xff]
    %v768 = vld [vmem:[#allocation7 + $0x50] sm:$0xff]
    %v769 = vld [vmem:[#allocation7 + $0x58] sm:$0xff]
    %v770 = vld [vmem:[#allocation7 + $0x60] sm:$0xff]
    %v771 = vld [vmem:[#allocation7 + $0x68] sm:$0xff]
    %v772 = vld [vmem:[#allocation7 + $0x70] sm:$0xff]
    %v773 = vld [vmem:[#allocation7 + $0x78] sm:$0xff]
    %v774 = vld [vmem:[#allocation7 + $0x80] sm:$0xff]
    %v775 = vld [vmem:[#allocation7 + $0x88] sm:$0xff]
    %v776 = vld [vmem:[#allocation7 + $0x90] sm:$0xff]
    %v777 = vld [vmem:[#allocation7 + $0x98] sm:$0xff]
    %v778 = vld [vmem:[#allocation7 + $0xa0] sm:$0xff]
    %v779 = vld [vmem:[#allocation7 + $0xa8] sm:$0xff]
    %v780 = vld [vmem:[#allocation7 + $0xb0] sm:$0xff]
    %v781 = vld [vmem:[#allocation7 + $0xb8] sm:$0xff]
    %v782 = vld [vmem:[#allocation7 + $0xc0] sm:$0xff]
    %v783 = vld [vmem:[#allocation7 + $0xc8] sm:$0xff]
    %v784 = vld [vmem:[#allocation7 + $0xd0] sm:$0xff]
    %v785 = vld [vmem:[#allocation7 + $0xd8] sm:$0xff]
    %v786 = vld [vmem:[#allocation7 + $0xe0] sm:$0xff]
    %v787 = vld [vmem:[#allocation7 + $0xe8] sm:$0xff]
    %v788 = vld [vmem:[#allocation7 + $0xf0] sm:$0xff]
    %v789 = vld [vmem:[#allocation7 + $0xf8] sm:$0xff]
    %v790 = vld [vmem:[%s4] sm:$0xf]
    %v792 = vlaneseq
    %v793 = vshrl.u32 %v792, 7
    %v794 = vsub.s32 0, %v793
    %v795 = vrot.slane %v790, %v794
    %v796 = vlaneseq
    %v797 = vshrl.u32 %v796, 7
    %v798 = vsub.s32 1, %v797
    %v799 = vrot.slane %v790, %v798
    %v800 = vlaneseq
    %v801 = vshrl.u32 %v800, 7
    %v802 = vsub.s32 2, %v801
    %v803 = vrot.slane %v790, %v802
    %v804 = vlaneseq
    %v805 = vshrl.u32 %v804, 7
    %v806 = vsub.s32 3, %v805
    %v807 = vrot.slane %v790, %v806
    %v844 = vunpack.c.l.b16 %v758
    %v845 = vunpack.c.h.b16 %v758
    %v846 = vunpack.c.l.b16 %v759
    %v847 = vunpack.c.h.b16 %v759
    %v848 = vunpack.c.l.b16 %v760
    %v849 = vunpack.c.h.b16 %v760
    %v850 = vunpack.c.l.b16 %v761
    %v851 = vunpack.c.h.b16 %v761
    %v852 = vunpack.c.l.b16 %v762
    %v853 = vunpack.c.h.b16 %v762
    %v854 = vunpack.c.l.b16 %v763
    %v855 = vunpack.c.h.b16 %v763
    %v856 = vunpack.c.l.b16 %v764
    %v857 = vunpack.c.h.b16 %v764
    %v858 = vunpack.c.l.b16 %v765
    %v859 = vunpack.c.h.b16 %v765
    %v860 = vunpack.c.l.b16 %v766
    %v861 = vunpack.c.h.b16 %v766
    %v862 = vunpack.c.l.b16 %v767
    %v863 = vunpack.c.h.b16 %v767
    %v864 = vunpack.c.l.b16 %v768
    %v865 = vunpack.c.h.b16 %v768
    %v866 = vunpack.c.l.b16 %v769
    %v867 = vunpack.c.h.b16 %v769
    %v868 = vunpack.c.l.b16 %v770
    %v869 = vunpack.c.h.b16 %v770
    %v870 = vunpack.c.l.b16 %v771
    %v871 = vunpack.c.h.b16 %v771
    %v872 = vunpack.c.l.b16 %v772
    %v873 = vunpack.c.h.b16 %v772
    %v874 = vunpack.c.l.b16 %v773
    %v875 = vunpack.c.h.b16 %v773
    %v876 = vunpack.c.l.b16 %v774
    %v877 = vunpack.c.h.b16 %v774
    %v878 = vunpack.c.l.b16 %v775
    %v879 = vunpack.c.h.b16 %v775
    %v880 = vunpack.c.l.b16 %v776
    %v881 = vunpack.c.h.b16 %v776
    %v882 = vunpack.c.l.b16 %v777
    %v883 = vunpack.c.h.b16 %v777
    %v884 = vunpack.c.l.b16 %v778
    %v885 = vunpack.c.h.b16 %v778
    %v886 = vunpack.c.l.b16 %v779
    %v887 = vunpack.c.h.b16 %v779
    %v888 = vunpack.c.l.b16 %v780
    %v889 = vunpack.c.h.b16 %v780
    %v890 = vunpack.c.l.b16 %v781
    %v891 = vunpack.c.h.b16 %v781
    %v892 = vunpack.c.l.b16 %v782
    %v893 = vunpack.c.h.b16 %v782
    %v894 = vunpack.c.l.b16 %v783
    %v895 = vunpack.c.h.b16 %v783
    %v896 = vunpack.c.l.b16 %v784
    %v897 = vunpack.c.h.b16 %v784
    %v898 = vunpack.c.l.b16 %v785
    %v899 = vunpack.c.h.b16 %v785
    %v900 = vunpack.c.l.b16 %v786
    %v901 = vunpack.c.h.b16 %v786
    %v902 = vunpack.c.l.b16 %v787
    %v903 = vunpack.c.h.b16 %v787
    %v904 = vunpack.c.l.b16 %v788
    %v905 = vunpack.c.h.b16 %v788
    %v906 = vunpack.c.l.b16 %v789
    %v907 = vunpack.c.h.b16 %v789
    %v908 = vpack.c.b16 %v848, %v844
    %v909 = vpack.c.b16 %v849, %v845
    %v910 = vpack.c.b16 %v850, %v846
    %v911 = vpack.c.b16 %v851, %v847
    %v912 = vpack.c.b16 %v856, %v852
    %v913 = vpack.c.b16 %v857, %v853
    %v914 = vpack.c.b16 %v858, %v854
    %v915 = vpack.c.b16 %v859, %v855
    %v916 = vpack.c.b16 %v864, %v860
    %v917 = vpack.c.b16 %v865, %v861
    %v918 = vpack.c.b16 %v866, %v862
    %v919 = vpack.c.b16 %v867, %v863
    %v920 = vpack.c.b16 %v872, %v868
    %v921 = vpack.c.b16 %v873, %v869
    %v922 = vpack.c.b16 %v874, %v870
    %v923 = vpack.c.b16 %v875, %v871
    %v924 = vpack.c.b16 %v880, %v876
    %v925 = vpack.c.b16 %v881, %v877
    %v926 = vpack.c.b16 %v882, %v878
    %v927 = vpack.c.b16 %v883, %v879
    %v928 = vpack.c.b16 %v888, %v884
    %v929 = vpack.c.b16 %v889, %v885
    %v930 = vpack.c.b16 %v890, %v886
    %v931 = vpack.c.b16 %v891, %v887
    %v932 = vpack.c.b16 %v896, %v892
    %v933 = vpack.c.b16 %v897, %v893
    %v934 = vpack.c.b16 %v898, %v894
    %v935 = vpack.c.b16 %v899, %v895
    %v936 = vpack.c.b16 %v904, %v900
    %v937 = vpack.c.b16 %v905, %v901
    %v938 = vpack.c.b16 %v906, %v902
    %v939 = vpack.c.b16 %v907, %v903
    %972 = vmatprep.subr.bf16.mxu0 %v909
    %973 = vmatpush1.bf16.msra.mxu0 %v908
    %974 = vmatprep.subr.bf16.mxu0 %v913
    %975 = vmatpush1.bf16.msra.mxu0 %v912
    %976 = vmatprep.subr.bf16.mxu0 %v917
    %977 = vmatpush1.bf16.msra.mxu0 %v916
    %978 = vmatprep.subr.bf16.mxu0 %v921
    %979 = vmatpush1.bf16.msra.mxu0 %v920
    %980 = vmatprep.subr.bf16.mxu0 %v925
    %981 = vmatpush1.bf16.msra.mxu0 %v924
    %982 = vmatprep.subr.bf16.mxu0 %v929
    %983 = vmatpush1.bf16.msra.mxu0 %v928
    %984 = vmatprep.subr.bf16.mxu0 %v933
    %985 = vmatpush1.bf16.msra.mxu0 %v932
    %986 = vmatprep.subr.bf16.mxu0 %v937
    %987 = vmatpush1.bf16.msra.mxu0 %v936
    %988 = vmatprep.subr.bf16.mxu0 0
    %989 = vmatpush1.bf16.msra.mxu0 0
    %990 = vmatprep.subr.bf16.mxu0 0
    %991 = vmatpush1.bf16.msra.mxu0 0
    %992 = vmatprep.subr.bf16.mxu0 0
    %993 = vmatpush1.bf16.msra.mxu0 0
    %994 = vmatprep.subr.bf16.mxu0 0
    %995 = vmatpush1.bf16.msra.mxu0 0
    %996 = vmatprep.subr.bf16.mxu0 0
    %997 = vmatpush1.bf16.msra.mxu0 0
    %998 = vmatprep.subr.bf16.mxu0 0
    %999 = vmatpush1.bf16.msra.mxu0 0
    %1000 = vmatprep.subr.bf16.mxu0 0
    %1001 = vmatpush1.bf16.msra.mxu0 0
    %1002 = vmatprep.subr.bf16.mxu0 0
    %1003 = vmatpush1.bf16.msra.mxu0 0
    %1004 = vmatprep.mubr.bf16.mxu0 0
    %1005 = vmatmul.mubr.bf16.gmra.mrb[0].mxu0 %v757
    %v1006 = vpop.f32.mrb[0].mxu0
    %v1007 = vadd.f32 %v795, %v1006
    %v1008 = vpop.f32.mrb[0].mxu0
    %v1009 = vadd.f32 %v799, %v1008
    %v1010 = vpop.f32.mrb[0].mxu0
    %v1011 = vpop.f32.mrb[0].mxu0
    %1012 = vdwg.mxu0
    %1013 = vmatprep.subr.bf16.mxu0 %v911
    %1014 = vmatpush1.bf16.msra.mxu0 %v910
    %1015 = vmatprep.subr.bf16.mxu0 %v915
    %1016 = vmatpush1.bf16.msra.mxu0 %v914
    %1017 = vmatprep.subr.bf16.mxu0 %v919
    %1018 = vmatpush1.bf16.msra.mxu0 %v918
    %1019 = vmatprep.subr.bf16.mxu0 %v923
    %1020 = vmatpush1.bf16.msra.mxu0 %v922
    %1021 = vmatprep.subr.bf16.mxu0 %v927
    %1022 = vmatpush1.bf16.msra.mxu0 %v926
    %1023 = vmatprep.subr.bf16.mxu0 %v931
    %1024 = vmatpush1.bf16.msra.mxu0 %v930
    %1025 = vmatprep.subr.bf16.mxu0 %v935
    %1026 = vmatpush1.bf16.msra.mxu0 %v934
    %1027 = vmatprep.subr.bf16.mxu0 %v939
    %1028 = vmatpush1.bf16.msra.mxu0 %v938
    %1029 = vmatprep.subr.bf16.mxu0 0
    %1030 = vmatpush1.bf16.msra.mxu0 0
    %1031 = vmatprep.subr.bf16.mxu0 0
    %1032 = vmatpush1.bf16.msra.mxu0 0
    %1033 = vmatprep.subr.bf16.mxu0 0
    %1034 = vmatpush1.bf16.msra.mxu0 0
    %1035 = vmatprep.subr.bf16.mxu0 0
    %1036 = vmatpush1.bf16.msra.mxu0 0
    %1037 = vmatprep.subr.bf16.mxu0 0
    %1038 = vmatpush1.bf16.msra.mxu0 0
    %1039 = vmatprep.subr.bf16.mxu0 0
    %1040 = vmatpush1.bf16.msra.mxu0 0
    %1041 = vmatprep.subr.bf16.mxu0 0
    %1042 = vmatpush1.bf16.msra.mxu0 0
    %1043 = vmatprep.subr.bf16.mxu0 0
    %1044 = vmatpush1.bf16.msra.mxu0 0
    %1045 = vmatprep.mubr.bf16.mxu0 0
    %1046 = vmatmul.mubr.bf16.gmra.mrb[0].mxu0 %v757
    %v1047 = vpop.f32.mrb[0].mxu0
    %v1048 = vadd.f32 %v803, %v1047
    %v1049 = vpop.f32.mrb[0].mxu0
    %v1050 = vadd.f32 %v807, %v1049
    %v1051 = vpop.f32.mrb[0].mxu0
    %v1052 = vpop.f32.mrb[0].mxu0
    %1053 = vdwg.mxu0
    %v1054 = vtanh.pop %v1007
    %v1055 = vtanh.pop %v1009
    %v1056 = vtanh.pop %v1048
    %v1057 = vtanh.pop %v1050
    %v1058 = vadd.f32 %v1054, 1.0
    %v1059 = vadd.f32 %v1055, 1.0
    %v1060 = vadd.f32 %v1056, 1.0
    %v1061 = vadd.f32 %v1057, 1.0
    %v1062 = vmul.f32 %v1058, 0.5
    %v1063 = vmul.f32 %v1059, 0.5
    %v1064 = vmul.f32 %v1060, 0.5
    %v1065 = vmul.f32 %v1061, 0.5
    %1066 = vst [vmem:[#allocation8] sm:$0xff] %v1062
    %1067 = vst [vmem:[#allocation8 + $0x8] sm:$0xff] %v1063
    %1068 = vst [vmem:[#allocation8 + $0x10] sm:$0xff] %v1064
    %1069 = vst [vmem:[#allocation8 + $0x18] sm:$0xff] %v1065
    // Predicated region
    $region34: #{tpu_custom_call.1} parent=1 // pred_check
      _
    $region35: #{tpu_custom_call.1} parent=1 // pred_check_branch
      %1071 = sbr.rel (0) target = $region37
    $region36: #{tpu_custom_call.1} parent=1 // pred_region
      %s1073 = ssub.s32 512, 512
      %1074 = vsyncadd [#allocation4], %s1073
      %s1076 = sshll.u32 [#allocation8], 4
      %s1077 = int_to_ptr.vmem [resolvable:$true] %s1076
      %1079 = dma.vmem_to_hbm [thread:$0]  %s1077, 512, %s5, [#allocation4]
    $region37: #{tpu_custom_call.1} parent=1 // pred_fallthru
      _
    // Predicated region
    $region38: #{tpu_custom_call.1} parent=1 // pred_check
      _
    $region39: #{tpu_custom_call.1} parent=1 // pred_check_branch
      %1081 = sbr.rel (0) target = $region41
    $region40: #{tpu_custom_call.1} parent=1 // pred_region
      %1082 = dma.done [#allocation4], 512
    $region41: #{tpu_custom_call.1} parent=1 // pred_fallthru
      _
    %1083 = vsyncpa [#allocation3], 1
    %1084 = vsyncpa [#allocation6], 1
    %1085 = vsyncpa [#allocation4], 1

</llo_original>
